<compile_context>
chip_gen: v7x
topology: tpu7x:2x2x1
jax: 0.10.0
libtpu: 0.0.40
codegen_flags: <defaults>
</compile_context>

<pallas_src>
import functools

import numpy as np
import jax
import jax.numpy as jnp
from jax.experimental import pallas as pl
from jax.experimental.pallas import tpu as pltpu


def _dwsep_kernel(x_ref, wt_ref, bf_ref, o_ref, *, td, k, ho, wpcin):
    # x_ref : (Dp, Hp, Wp*Cin)        padded activations for one batch element
    #                                 (block index depends only on n -> resident across d-tiles)
    # wt_ref: (K*K, Wp*Cin, Wo*Cout)  block-Toeplitz fused (depthwise * pointwise) weights
    # bf_ref: (1, Wo*Cout)            fused bias (W_pw @ b_dw + b_pw), tiled across W
    # o_ref : (td*Ho, Wo*Cout)        lane-dense output slab for this (n, d-tile)
    dt = pl.program_id(1)
    d0 = pl.multiple_of(dt * td, td)
    rows = td * ho

    acc = None
    for kd in range(k):
        for kh in range(k):
            # Slice straight from the ref: dynamic offset only on the leading (D) axis,
            # static offsets elsewhere, full (lane-dense) minor dim.
            a = x_ref[pl.ds(d0 + kd, td), kh:kh + ho, :]            # (td, Ho, Wp*Cin)
            a = a.reshape(rows, wpcin)                              # leading-dim merge only
            contrib = jnp.dot(a, wt_ref[kd * k + kh],
                              preferred_element_type=jnp.float32)   # (td*Ho, Wo*Cout)
            acc = contrib if acc is None else acc + contrib         # f32 vreg accumulation
    acc = acc + bf_ref[...]                                         # broadcast fused bias
    o_ref[...] = acc.astype(o_ref.dtype)                            # no repack before store


def depthwise_separable_conv3d(x_ncdhw, w_dw, b_dw, w_pw, b_pw, *, padding, d_tile=None):
    """Fused depthwise(KxKxK, groups=Cin) + pointwise(1x1x1) Conv3d.

    x_ncdhw: (N, Cin, D, H, W); w_dw: (Cin, 1, K, K, K); b_dw: (Cin,)
    w_pw: (Cout, Cin, 1, 1, 1); b_pw: (Cout,).  Returns (N, Cout, D', H', W').
    """
    N, Cin, D, H, W = x_ncdhw.shape
    Cout = w_pw.shape[0]
    K = w_dw.shape[-1]
    p = padding
    assert w_dw.shape == (Cin, 1, K, K, K), "only kernels_per_layer=1 supported"

    Dp, Hp, Wp = D + 2 * p, H + 2 * p, W + 2 * p
    Do, Ho, Wo = Dp - K + 1, Hp - K + 1, Wp - K + 1              # torch Conv3d output sizes

    cdtype = x_ncdhw.dtype                                       # keep bf16 native (no f32 upcast)
    isz = jnp.dtype(cdtype).itemsize

    # --- activations: channels-last, zero-padded, (W, Cin) collapsed into the lane axis ---
    x = jnp.transpose(x_ncdhw, (0, 2, 3, 4, 1))                  # NDHWC
    xp = jnp.pad(x, ((0, 0), (p, p), (p, p), (p, p), (0, 0)))
    xp = xp.reshape(N, Dp, Hp, Wp * Cin)                         # lane-dense last axis

    # --- fused weights: depthwise folded into pointwise, then kw + channels folded into a
    #     block-Toeplitz contraction along W -------------------------------------------------
    wdw = w_dw[:, 0]                                             # (Cin, K, K, K)
    wpw = w_pw[:, :, 0, 0, 0]                                    # (Cout, Cin)
    # wf5[kd, kh, kw, c, o] = w_dw[c, kd, kh, kw] * w_pw[o, c]
    wf5 = (jnp.transpose(wdw, (1, 2, 3, 0))[..., None] *
           jnp.transpose(wpw, (1, 0))[None, None, None, :, :]).astype(jnp.float32)
    # wt[kd, kh, wp, c, w, o] = wf5[kd, kh, wp - w, c, o] for 0 <= wp - w < K, else 0
    wt = jnp.zeros((K, K, Wp, Cin, Wo, Cout), jnp.float32)
    for w0 in range(Wo):
        wt = wt.at[:, :, w0:w0 + K, :, w0, :].set(wf5)
    wt = wt.reshape(K * K, Wp * Cin, Wo * Cout).astype(cdtype)   # MXU RHS in activation dtype
    # fused bias, tiled across W so it broadcasts over the lane-dense output slab
    bf = (wpw.astype(jnp.float32) @ b_dw.astype(jnp.float32) + b_pw.astype(jnp.float32))
    bf_row = jnp.tile(bf, Wo).reshape(1, Wo * Cout)

    # --- VMEM budget & d-tile selection -----------------------------------------------------
    try:
        vmem_cap = int(pltpu.get_tpu_info().vmem_capacity_bytes)
    except Exception:
        vmem_cap = 64 * 1024 * 1024                              # conservative (v7x per-core)
    budget = int(0.75 * vmem_cap)                                # ~48 MiB v7x, ~96 MiB v5e/v6e

    def vmem_est(td):
        x_b = 2 * Dp * Hp * Wp * Cin * isz                       # input block (double-buffered)
        wt_b = 2 * (K * K) * (Wp * Cin) * (Wo * Cout) * isz
        bf_b = 2 * Wo * Cout * 4
        out_b = 2 * td * Ho * Wo * Cout * isz
        acc_b = td * Ho * Wo * Cout * 4                          # f32 accumulator
        return x_b + wt_b + bf_b + out_b + acc_b

    if d_tile is None:
        d_tile = 1
        for cand in sorted((t for t in range(1, Do + 1) if Do % t == 0), reverse=True):
            if vmem_est(cand) <= budget and cand * Ho * Wo * Cout * 4 <= 2 * 1024 * 1024:
                d_tile = cand
                break
    assert Do % d_tile == 0, "d_tile must divide the output depth"
    n_dt = Do // d_tile
    vmem_limit = int(min(budget, max(32 * 1024 * 1024, vmem_est(d_tile) + (8 << 20))))

    kernel = functools.partial(_dwsep_kernel, td=d_tile, k=K, ho=Ho, wpcin=Wp * Cin)

    out = pl.pallas_call(
        kernel,
        out_shape=jax.ShapeDtypeStruct((N, n_dt, d_tile * Ho, Wo * Cout), cdtype),
        grid_spec=pltpu.PrefetchScalarGridSpec(
            num_scalar_prefetch=0,
            grid=(N, n_dt),
            in_specs=[
                # Full padded volume of one batch element; block index depends only on n,
                # so it stays resident in VMEM across the whole d-tile axis (no re-DMA).
                pl.BlockSpec((None, Dp, Hp, Wp * Cin), lambda n, d: (n, 0, 0, 0)),
                pl.BlockSpec((K * K, Wp * Cin, Wo * Cout), lambda n, d: (0, 0, 0)),
                pl.BlockSpec((1, Wo * Cout), lambda n, d: (0, 0)),
            ],
            out_specs=pl.BlockSpec((None, None, d_tile * Ho, Wo * Cout),
                                   lambda n, d: (n, d, 0, 0)),
        ),
        compiler_params=pltpu.CompilerParams(
            # Batch axis parallel (v7x megacore splits on N, never duplicating the resident
            # volume); d-tile axis arbitrary (it revisits the same x block).
            dimension_semantics=("parallel", "arbitrary"),
            vmem_limit_bytes=vmem_limit,
        ),
    )(xp, wt, bf_row)

    out = out.reshape(N, Do, Ho, Wo, Cout)                       # pure reshape (no relayout)
    # TODO(synk): if the downstream consumer accepts channels-last (NDHWC), return `out`
    # directly and skip this transpose (saves one full HBM pass).
    return jnp.transpose(out, (0, 4, 1, 2, 3))                   # NCDHW, matches torch


def _reference(x, w_dw, b_dw, w_pw, b_pw, padding):
    """float64 numpy reference mirroring torch: depthwise Conv3d (groups=Cin), then 1x1x1."""
    x = np.asarray(x, np.float64)
    wd = np.asarray(w_dw, np.float64)[:, 0]                      # (Cin, K, K, K)
    wp = np.asarray(w_pw, np.float64)[:, :, 0, 0, 0]             # (Cout, Cin)
    bd = np.asarray(b_dw, np.float64)
    bp = np.asarray(b_pw, np.float64)
    N, Cin, D, H, W = x.shape
    K = wd.shape[-1]
    p = padding
    xp = np.pad(x, ((0, 0), (0, 0), (p, p), (p, p), (p, p)))
    Do, Ho, Wo = D + 2 * p - K + 1, H + 2 * p - K + 1, W + 2 * p - K + 1
    mid = np.zeros((N, Cin, Do, Ho, Wo))
    for kd in range(K):
        for kh in range(K):
            for kw in range(K):
                mid += (wd[:, kd, kh, kw][None, :, None, None, None] *
                        xp[:, :, kd:kd + Do, kh:kh + Ho, kw:kw + Wo])
    mid += bd[None, :, None, None, None]
    out = np.einsum('oc,ncdhw->nodhw', wp, mid) + bp[None, :, None, None, None]
    return out


if __name__ == "__main__":
    # Small shapes consistent with the module: batch=2, nin=4, nout=8, 8^3 volume, 3x3x3, pad=1.
    N, Cin, Cout = 2, 4, 8
    D = H = W = 8
    K, pad = 3, 1

    key = jax.random.PRNGKey(0)
    kx, k1, k2, k3, k4 = jax.random.split(key, 5)
    x = jax.random.normal(kx, (N, Cin, D, H, W), dtype=jnp.float32)
    w_dw = jax.random.normal(k1, (Cin, 1, K, K, K), dtype=jnp.float32) * 0.1
    b_dw = jax.random.normal(k2, (Cin,), dtype=jnp.float32) * 0.1
    w_pw = jax.random.normal(k3, (Cout, Cin, 1, 1, 1), dtype=jnp.float32) * 0.1
    b_pw = jax.random.normal(k4, (Cout,), dtype=jnp.float32) * 0.1

    out = depthwise_separable_conv3d(x, w_dw, b_dw, w_pw, b_pw, padding=pad)
    out = jax.block_until_ready(out)

    ref = _reference(x, w_dw, b_dw, w_pw, b_pw, pad)
    assert out.shape == (N, Cout, D, H, W), out.shape
    # Tolerance sized for the TPU MXU's default (bf16-pass) handling of f32 matmuls.
    diff = np.max(np.abs(np.asarray(out, np.float64) - ref))
    assert np.allclose(np.asarray(out, np.float64), ref, atol=5e-3, rtol=5e-3), float(diff)

    print("KERNEL_OK")
</pallas_src>

<mosaic_0001>
module attributes {stable_mosaic.version = 11 : i64} {
  func.func @_dwsep_kernel(%arg0: i32, %arg1: i32, %arg2: memref<1x10x10x40xf32, #tpu.memory_space<vmem>>, %arg3: memref<9x40x64xf32, #tpu.memory_space<vmem>>, %arg4: memref<1x64xf32, #tpu.memory_space<vmem>>, %arg5: memref<1x1x64x64xf32, #tpu.memory_space<vmem>>) attributes {dimension_semantics = [#tpu.dimension_semantics<parallel>, #tpu.dimension_semantics<arbitrary>], iteration_bounds = array<i64: 2, 1>, scalar_prefetch = 0 : i64, scratch_operands = 0 : i64, tpu.core_type = #tpu.core_type<tc>, window_params = [{transform_indices = @transform_0, window_bounds = array<i64: 1, 10, 10, 40>}, {pipeline_mode = #tpu.pipeline_mode<synchronous>, transform_indices = @transform_1, window_bounds = array<i64: 9, 40, 64>}, {pipeline_mode = #tpu.pipeline_mode<synchronous>, transform_indices = @transform_2, window_bounds = array<i64: 1, 64>}, {transform_indices = @transform_3, window_bounds = array<i64: 1, 1, 64, 64>}]} {
    %c8_i32 = arith.constant 8 : i32
    %0 = arith.muli %arg1, %c8_i32 : i32
    %1 = tpu.assume_multiple %0, 8 : i32
    %c0_i32 = arith.constant 0 : i32
    %2 = arith.addi %1, %c0_i32 : i32
    %c0 = arith.constant 0 : index
    %3 = arith.index_cast %2 : i32 to index
    %c0_0 = arith.constant 0 : index
    %c0_1 = arith.constant 0 : index
    %4 = vector.load %arg2[%c0, %3, %c0_0, %c0_1] : memref<1x10x10x40xf32, #tpu.memory_space<vmem>>, vector<1x8x8x40xf32>
    %5 = vector.shape_cast %4 : vector<1x8x8x40xf32> to vector<8x8x40xf32>
    %6 = vector.shape_cast %5 : vector<8x8x40xf32> to vector<64x40xf32>
    %c0_2 = arith.constant 0 : index
    %c0_3 = arith.constant 0 : index
    %c0_4 = arith.constant 0 : index
    %7 = vector.load %arg3[%c0_2, %c0_3, %c0_4] : memref<9x40x64xf32, #tpu.memory_space<vmem>>, vector<1x40x64xf32>
    %8 = vector.shape_cast %7 : vector<1x40x64xf32> to vector<40x64xf32>
    %cst = arith.constant dense<0.000000e+00> : vector<64x64xf32>
    %9 = tpu.matmul %6, %8, %cst {dimension_numbers = #tpu.dot_dimension_numbers<[1], [0], [0], [1], [0, 0, 1, 1], [], []>} : vector<64x40xf32>, vector<40x64xf32>, vector<64x64xf32> -> vector<64x64xf32>
    %c0_i32_5 = arith.constant 0 : i32
    %10 = arith.addi %1, %c0_i32_5 : i32
    %c0_6 = arith.constant 0 : index
    %11 = arith.index_cast %10 : i32 to index
    %c1 = arith.constant 1 : index
    %c0_7 = arith.constant 0 : index
    %12 = vector.load %arg2[%c0_6, %11, %c1, %c0_7] : memref<1x10x10x40xf32, #tpu.memory_space<vmem>>, vector<1x8x8x40xf32>
    %13 = vector.shape_cast %12 : vector<1x8x8x40xf32> to vector<8x8x40xf32>
    %14 = vector.shape_cast %13 : vector<8x8x40xf32> to vector<64x40xf32>
    %c1_8 = arith.constant 1 : index
    %c0_9 = arith.constant 0 : index
    %c0_10 = arith.constant 0 : index
    %15 = vector.load %arg3[%c1_8, %c0_9, %c0_10] : memref<9x40x64xf32, #tpu.memory_space<vmem>>, vector<1x40x64xf32>
    %16 = vector.shape_cast %15 : vector<1x40x64xf32> to vector<40x64xf32>
    %cst_11 = arith.constant dense<0.000000e+00> : vector<64x64xf32>
    %17 = tpu.matmul %14, %16, %cst_11 {dimension_numbers = #tpu.dot_dimension_numbers<[1], [0], [0], [1], [0, 0, 1, 1], [], []>} : vector<64x40xf32>, vector<40x64xf32>, vector<64x64xf32> -> vector<64x64xf32>
    %18 = arith.addf %9, %17 : vector<64x64xf32>
    %c0_i32_12 = arith.constant 0 : i32
    %19 = arith.addi %1, %c0_i32_12 : i32
    %c0_13 = arith.constant 0 : index
    %20 = arith.index_cast %19 : i32 to index
    %c2 = arith.constant 2 : index
    %c0_14 = arith.constant 0 : index
    %21 = vector.load %arg2[%c0_13, %20, %c2, %c0_14] : memref<1x10x10x40xf32, #tpu.memory_space<vmem>>, vector<1x8x8x40xf32>
    %22 = vector.shape_cast %21 : vector<1x8x8x40xf32> to vector<8x8x40xf32>
    %23 = vector.shape_cast %22 : vector<8x8x40xf32> to vector<64x40xf32>
    %c2_15 = arith.constant 2 : index
    %c0_16 = arith.constant 0 : index
    %c0_17 = arith.constant 0 : index
    %24 = vector.load %arg3[%c2_15, %c0_16, %c0_17] : memref<9x40x64xf32, #tpu.memory_space<vmem>>, vector<1x40x64xf32>
    %25 = vector.shape_cast %24 : vector<1x40x64xf32> to vector<40x64xf32>
    %cst_18 = arith.constant dense<0.000000e+00> : vector<64x64xf32>
    %26 = tpu.matmul %23, %25, %cst_18 {dimension_numbers = #tpu.dot_dimension_numbers<[1], [0], [0], [1], [0, 0, 1, 1], [], []>} : vector<64x40xf32>, vector<40x64xf32>, vector<64x64xf32> -> vector<64x64xf32>
    %27 = arith.addf %18, %26 : vector<64x64xf32>
    %c1_i32 = arith.constant 1 : i32
    %28 = arith.addi %1, %c1_i32 : i32
    %c0_19 = arith.constant 0 : index
    %29 = arith.index_cast %28 : i32 to index
    %c0_20 = arith.constant 0 : index
    %c0_21 = arith.constant 0 : index
    %30 = vector.load %arg2[%c0_19, %29, %c0_20, %c0_21] : memref<1x10x10x40xf32, #tpu.memory_space<vmem>>, vector<1x8x8x40xf32>
    %31 = vector.shape_cast %30 : vector<1x8x8x40xf32> to vector<8x8x40xf32>
    %32 = vector.shape_cast %31 : vector<8x8x40xf32> to vector<64x40xf32>
    %c3 = arith.constant 3 : index
    %c0_22 = arith.constant 0 : index
    %c0_23 = arith.constant 0 : index
    %33 = vector.load %arg3[%c3, %c0_22, %c0_23] : memref<9x40x64xf32, #tpu.memory_space<vmem>>, vector<1x40x64xf32>
    %34 = vector.shape_cast %33 : vector<1x40x64xf32> to vector<40x64xf32>
    %cst_24 = arith.constant dense<0.000000e+00> : vector<64x64xf32>
    %35 = tpu.matmul %32, %34, %cst_24 {dimension_numbers = #tpu.dot_dimension_numbers<[1], [0], [0], [1], [0, 0, 1, 1], [], []>} : vector<64x40xf32>, vector<40x64xf32>, vector<64x64xf32> -> vector<64x64xf32>
    %36 = arith.addf %27, %35 : vector<64x64xf32>
    %c1_i32_25 = arith.constant 1 : i32
    %37 = arith.addi %1, %c1_i32_25 : i32
    %c0_26 = arith.constant 0 : index
    %38 = arith.index_cast %37 : i32 to index
    %c1_27 = arith.constant 1 : index
    %c0_28 = arith.constant 0 : index
    %39 = vector.load %arg2[%c0_26, %38, %c1_27, %c0_28] : memref<1x10x10x40xf32, #tpu.memory_space<vmem>>, vector<1x8x8x40xf32>
    %40 = vector.shape_cast %39 : vector<1x8x8x40xf32> to vector<8x8x40xf32>
    %41 = vector.shape_cast %40 : vector<8x8x40xf32> to vector<64x40xf32>
    %c4 = arith.constant 4 : index
    %c0_29 = arith.constant 0 : index
    %c0_30 = arith.constant 0 : index
    %42 = vector.load %arg3[%c4, %c0_29, %c0_30] : memref<9x40x64xf32, #tpu.memory_space<vmem>>, vector<1x40x64xf32>
    %43 = vector.shape_cast %42 : vector<1x40x64xf32> to vector<40x64xf32>
    %cst_31 = arith.constant dense<0.000000e+00> : vector<64x64xf32>
    %44 = tpu.matmul %41, %43, %cst_31 {dimension_numbers = #tpu.dot_dimension_numbers<[1], [0], [0], [1], [0, 0, 1, 1], [], []>} : vector<64x40xf32>, vector<40x64xf32>, vector<64x64xf32> -> vector<64x64xf32>
    %45 = arith.addf %36, %44 : vector<64x64xf32>
    %c1_i32_32 = arith.constant 1 : i32
    %46 = arith.addi %1, %c1_i32_32 : i32
    %c0_33 = arith.constant 0 : index
    %47 = arith.index_cast %46 : i32 to index
    %c2_34 = arith.constant 2 : index
    %c0_35 = arith.constant 0 : index
    %48 = vector.load %arg2[%c0_33, %47, %c2_34, %c0_35] : memref<1x10x10x40xf32, #tpu.memory_space<vmem>>, vector<1x8x8x40xf32>
    %49 = vector.shape_cast %48 : vector<1x8x8x40xf32> to vector<8x8x40xf32>
    %50 = vector.shape_cast %49 : vector<8x8x40xf32> to vector<64x40xf32>
    %c5 = arith.constant 5 : index
    %c0_36 = arith.constant 0 : index
    %c0_37 = arith.constant 0 : index
    %51 = vector.load %arg3[%c5, %c0_36, %c0_37] : memref<9x40x64xf32, #tpu.memory_space<vmem>>, vector<1x40x64xf32>
    %52 = vector.shape_cast %51 : vector<1x40x64xf32> to vector<40x64xf32>
    %cst_38 = arith.constant dense<0.000000e+00> : vector<64x64xf32>
    %53 = tpu.matmul %50, %52, %cst_38 {dimension_numbers = #tpu.dot_dimension_numbers<[1], [0], [0], [1], [0, 0, 1, 1], [], []>} : vector<64x40xf32>, vector<40x64xf32>, vector<64x64xf32> -> vector<64x64xf32>
    %54 = arith.addf %45, %53 : vector<64x64xf32>
    %c2_i32 = arith.constant 2 : i32
    %55 = arith.addi %1, %c2_i32 : i32
    %c0_39 = arith.constant 0 : index
    %56 = arith.index_cast %55 : i32 to index
    %c0_40 = arith.constant 0 : index
    %c0_41 = arith.constant 0 : index
    %57 = vector.load %arg2[%c0_39, %56, %c0_40, %c0_41] : memref<1x10x10x40xf32, #tpu.memory_space<vmem>>, vector<1x8x8x40xf32>
    %58 = vector.shape_cast %57 : vector<1x8x8x40xf32> to vector<8x8x40xf32>
    %59 = vector.shape_cast %58 : vector<8x8x40xf32> to vector<64x40xf32>
    %c6 = arith.constant 6 : index
    %c0_42 = arith.constant 0 : index
    %c0_43 = arith.constant 0 : index
    %60 = vector.load %arg3[%c6, %c0_42, %c0_43] : memref<9x40x64xf32, #tpu.memory_space<vmem>>, vector<1x40x64xf32>
    %61 = vector.shape_cast %60 : vector<1x40x64xf32> to vector<40x64xf32>
    %cst_44 = arith.constant dense<0.000000e+00> : vector<64x64xf32>
    %62 = tpu.matmul %59, %61, %cst_44 {dimension_numbers = #tpu.dot_dimension_numbers<[1], [0], [0], [1], [0, 0, 1, 1], [], []>} : vector<64x40xf32>, vector<40x64xf32>, vector<64x64xf32> -> vector<64x64xf32>
    %63 = arith.addf %54, %62 : vector<64x64xf32>
    %c2_i32_45 = arith.constant 2 : i32
    %64 = arith.addi %1, %c2_i32_45 : i32
    %c0_46 = arith.constant 0 : index
    %65 = arith.index_cast %64 : i32 to index
    %c1_47 = arith.constant 1 : index
    %c0_48 = arith.constant 0 : index
    %66 = vector.load %arg2[%c0_46, %65, %c1_47, %c0_48] : memref<1x10x10x40xf32, #tpu.memory_space<vmem>>, vector<1x8x8x40xf32>
    %67 = vector.shape_cast %66 : vector<1x8x8x40xf32> to vector<8x8x40xf32>
    %68 = vector.shape_cast %67 : vector<8x8x40xf32> to vector<64x40xf32>
    %c7 = arith.constant 7 : index
    %c0_49 = arith.constant 0 : index
    %c0_50 = arith.constant 0 : index
    %69 = vector.load %arg3[%c7, %c0_49, %c0_50] : memref<9x40x64xf32, #tpu.memory_space<vmem>>, vector<1x40x64xf32>
    %70 = vector.shape_cast %69 : vector<1x40x64xf32> to vector<40x64xf32>
    %cst_51 = arith.constant dense<0.000000e+00> : vector<64x64xf32>
    %71 = tpu.matmul %68, %70, %cst_51 {dimension_numbers = #tpu.dot_dimension_numbers<[1], [0], [0], [1], [0, 0, 1, 1], [], []>} : vector<64x40xf32>, vector<40x64xf32>, vector<64x64xf32> -> vector<64x64xf32>
    %72 = arith.addf %63, %71 : vector<64x64xf32>
    %c2_i32_52 = arith.constant 2 : i32
    %73 = arith.addi %1, %c2_i32_52 : i32
    %c0_53 = arith.constant 0 : index
    %74 = arith.index_cast %73 : i32 to index
    %c2_54 = arith.constant 2 : index
    %c0_55 = arith.constant 0 : index
    %75 = vector.load %arg2[%c0_53, %74, %c2_54, %c0_55] : memref<1x10x10x40xf32, #tpu.memory_space<vmem>>, vector<1x8x8x40xf32>
    %76 = vector.shape_cast %75 : vector<1x8x8x40xf32> to vector<8x8x40xf32>
    %77 = vector.shape_cast %76 : vector<8x8x40xf32> to vector<64x40xf32>
    %c8 = arith.constant 8 : index
    %c0_56 = arith.constant 0 : index
    %c0_57 = arith.constant 0 : index
    %78 = vector.load %arg3[%c8, %c0_56, %c0_57] : memref<9x40x64xf32, #tpu.memory_space<vmem>>, vector<1x40x64xf32>
    %79 = vector.shape_cast %78 : vector<1x40x64xf32> to vector<40x64xf32>
    %cst_58 = arith.constant dense<0.000000e+00> : vector<64x64xf32>
    %80 = tpu.matmul %77, %79, %cst_58 {dimension_numbers = #tpu.dot_dimension_numbers<[1], [0], [0], [1], [0, 0, 1, 1], [], []>} : vector<64x40xf32>, vector<40x64xf32>, vector<64x64xf32> -> vector<64x64xf32>
    %81 = arith.addf %72, %80 : vector<64x64xf32>
    %c0_59 = arith.constant 0 : index
    %c0_60 = arith.constant 0 : index
    %82 = vector.load %arg4[%c0_59, %c0_60] : memref<1x64xf32, #tpu.memory_space<vmem>>, vector<1x64xf32>
    %83 = vector.broadcast %82 : vector<1x64xf32> to vector<64x64xf32>
    %84 = arith.addf %81, %83 : vector<64x64xf32>
    %c0_61 = arith.constant 0 : index
    %c0_62 = arith.constant 0 : index
    %c0_63 = arith.constant 0 : index
    %c0_64 = arith.constant 0 : index
    %85 = vector.load %arg5[%c0_61, %c0_62, %c0_63, %c0_64] : memref<1x1x64x64xf32, #tpu.memory_space<vmem>>, vector<1x1x64x64xf32>
    %86 = vector.shape_cast %85 : vector<1x1x64x64xf32> to vector<64x64xf32>
    %87 = vector.shape_cast %84 : vector<64x64xf32> to vector<1x1x64x64xf32>
    tpu.vector_store %arg5[%c0_61, %c0_62, %c0_63, %c0_64], %87 {strides = array<i32>} : memref<1x1x64x64xf32, #tpu.memory_space<vmem>>, vector<1x1x64x64xf32>,
    return
  }
  func.func @transform_0(%arg0: i32, %arg1: i32) -> (i32, i32, i32, i32) {
    %c0_i32 = arith.constant 0 : i32
    %c0_i32_0 = arith.constant 0 : i32
    %c0_i32_1 = arith.constant 0 : i32
    %c0_i32_2 = arith.constant 0 : i32
    return %arg0, %c0_i32, %c0_i32_0, %c0_i32_1 : i32, i32, i32, i32
  }
  func.func @transform_1(%arg0: i32, %arg1: i32) -> (i32, i32, i32) {
    %c0_i32 = arith.constant 0 : i32
    %c0_i32_0 = arith.constant 0 : i32
    %c0_i32_1 = arith.constant 0 : i32
    %c0_i32_2 = arith.constant 0 : i32
    return %c0_i32, %c0_i32_0, %c0_i32_1 : i32, i32, i32
  }
  func.func @transform_2(%arg0: i32, %arg1: i32) -> (i32, i32) {
    %c0_i32 = arith.constant 0 : i32
    %c0_i32_0 = arith.constant 0 : i32
    %c0_i32_1 = arith.constant 0 : i32
    return %c0_i32, %c0_i32_0 : i32, i32
  }
  func.func @transform_3(%arg0: i32, %arg1: i32) -> (i32, i32, i32, i32) {
    %c0_i32 = arith.constant 0 : i32
    %c0_i32_0 = arith.constant 0 : i32
    %c0_i32_1 = arith.constant 0 : i32
    return %arg0, %arg1, %c0_i32, %c0_i32_0 : i32, i32, i32, i32
  }
}

</mosaic_0001>

<llo_original>
// kernel: tpu_custom_call.1
$region0: #{tpu_custom_call.1}
  #allocation0 [shape = 'u32[]', space=smem, size = 0x4, offset = 0x4, fixed_abs, tag = 'smem constant byte address 0x4 - core index']
  #allocation1 [shape = 'u32[144,128]{1,0:T(1,128)}', space=vmem, size = 0x12000, scoped, tag = 'internal scratch']
  %s0 = inlined_call_operand.vmem [shape: f32[2,10,10,40], index: 0, kind: input, shape index: {}]
  %s1 = inlined_call_operand.vmem [shape: f32[9,40,64], index: 1, kind: input, shape index: {}]
  %s2 = inlined_call_operand.vmem [shape: f32[1,64], index: 2, kind: input, shape index: {}]
  %s3 = inlined_call_operand.hbm [shape: f32[2,1,64,64], index: 3, kind: output, shape index: {}]
  %s4 = sld [smem:[#allocation0]]
  $region45: #{tpu_custom_call.1} parent=0
    _
  %s6 = ssub.s32 1, %s4
  %s7 = scalar_select 0, %s6, %s4
  $region1: #{tpu_custom_call.1} parent=0
    #allocation2 [shape = 'u8[65536]{0}', space=vmem, size = 0x10000, scoped, tag = 'output window, operand 0']
    #allocation3 [shape = 's32[2]{0}', space=sflag, size = 0x8, scoped, tag = 'scoped memory for tpu_custom_call.1']
    %8 = vsyncpa [#allocation3], 0
    %s9 = scalar_lea.sflag [#allocation3], 1
    %10 = vsyncpa %s9, 0
    loop: start=0, step=1, limit=4
    $region2: #{tpu_custom_call.1} parent=1 // loop_pre_header
      _
    $region3: #{tpu_custom_call.1} parent=1 // loop_header
      %s12 = sphi 0, %s16
      %p13 = scmp.ge.s32.totalorder %s12, 4
      %s19 = sphi 0, %s31
      %s20 = sphi 0, %s27
      %s21 = sphi 0, %s19
      %s22 = sphi 0, %s20
      %s23 = sphi 0, %s21
      %s24 = sphi 0, %s22
      %s34 = sphi 0, %s36
      %s37 = sphi 0, %s34
      %s38 = sphi 0, %s37
      %s54 = sphi 0, %s38
      %s58 = sphi 0, %s58
      %s60 = sphi 0, %s58
      %s61 = sphi 0, %s60
      %s75 = sphi 0, %s61
      %s79 = sphi 0, %s79
      %s81 = sphi 0, %s79
      %s82 = sphi 0, %s81
      %s96 = sphi 0, %s82
      %s104 = sphi 0, %s106
      %s107 = sphi 0, %s104
      %s108 = sphi 0, %s107
      %s124 = sphi 0, %s108
    $region4: #{tpu_custom_call.1} parent=1 // loop_header_branch
      %15 = sbr.rel (%p13) target = $region8
    $region5: #{tpu_custom_call.1} parent=1 // loop_body
      %s17 = ssub.s32 %s12, 1
      %s18 = ssub.s32 %s12, 2
      %s25 = sadd.s32 1, %s20
      %p26 = scmp.ge.s32.totalorder %s25, 1
      %s27 = scalar_select %p26, 0, %s25
      %s28 = sadd.s32 1, %s19
      %s29 = scalar_select %p26, %s28, %s19
      %p30 = scmp.ge.s32.totalorder %s29, 2
      %s31 = scalar_select %p30, 0, %s29
      %s32 = ssub.s32 %s19, %s31
      %p33 = scmp.eq.s32.totalorder %s32, 0
      %s35 = sadd.s32 %s34, 1
      %s36 = scalar_select %p33, %s34, %s35
      %p39 = pneg %p33
      %p40 = scmp.eq.s32.totalorder %s12, 1
      %p41 = por %p39, %p40
      %p42 = scmp.ne.s32.totalorder %s34, %s37
      %p43 = scmp.eq.s32.totalorder %s12, 0
      %p44 = por %p42, %p43
      %p45 = scmp.ne.s32.totalorder %s34, %s37
      %p46 = scmp.eq.s32.totalorder %s17, 1
      %p47 = por %p45, %p46
      %p48 = scmp.ne.s32.totalorder %s37, %s38
      %p49 = scmp.eq.s32.totalorder %s17, 0
      %p50 = por %p48, %p49
      %p51 = scmp.ne.s32.totalorder %s37, %s38
      %p52 = scmp.eq.s32.totalorder %s18, 1
      %p53 = por %p51, %p52
      %p55 = scmp.ne.s32.totalorder %s38, %s54
      %p56 = scmp.eq.s32.totalorder %s18, 0
      %p57 = por %p55, %p56
      %s59 = sadd.s32 %s58, 1
      %p62 = scmp.eq.s32.totalorder %s12, 1
      %p63 = scmp.ne.s32.totalorder %s58, %s60
      %p64 = scmp.eq.s32.totalorder %s12, 0
      %p65 = por %p63, %p64
      %p66 = scmp.ne.s32.totalorder %s58, %s60
      %p67 = scmp.eq.s32.totalorder %s17, 1
      %p68 = por %p66, %p67
      %p69 = scmp.ne.s32.totalorder %s60, %s61
      %p70 = scmp.eq.s32.totalorder %s17, 0
      %p71 = por %p69, %p70
      %p72 = scmp.ne.s32.totalorder %s60, %s61
      %p73 = scmp.eq.s32.totalorder %s18, 1
      %p74 = por %p72, %p73
      %p76 = scmp.ne.s32.totalorder %s61, %s75
      %p77 = scmp.eq.s32.totalorder %s18, 0
      %p78 = por %p76, %p77
      %s80 = sadd.s32 %s79, 1
      %p83 = scmp.eq.s32.totalorder %s12, 1
      %p84 = scmp.ne.s32.totalorder %s79, %s81
      %p85 = scmp.eq.s32.totalorder %s12, 0
      %p86 = por %p84, %p85
      %p87 = scmp.ne.s32.totalorder %s79, %s81
      %p88 = scmp.eq.s32.totalorder %s17, 1
      %p89 = por %p87, %p88
      %p90 = scmp.ne.s32.totalorder %s81, %s82
      %p91 = scmp.eq.s32.totalorder %s17, 0
      %p92 = por %p90, %p91
      %p93 = scmp.ne.s32.totalorder %s81, %s82
      %p94 = scmp.eq.s32.totalorder %s18, 1
      %p95 = por %p93, %p94
      %p97 = scmp.ne.s32.totalorder %s82, %s96
      %p98 = scmp.eq.s32.totalorder %s18, 0
      %p99 = por %p97, %p98
      %s100 = ssub.s32 %s19, %s31
      %s101 = ssub.s32 %s20, %s27
      %s102 = sor.u32 %s100, %s101
      %p103 = scmp.eq.s32.totalorder %s102, 0
      %s105 = sadd.s32 %s104, 1
      %s106 = scalar_select %p103, %s104, %s105
      %p109 = pneg %p103
      %p110 = scmp.eq.s32.totalorder %s12, 1
      %p111 = por %p109, %p110
      %p112 = scmp.ne.s32.totalorder %s104, %s107
      %p113 = scmp.eq.s32.totalorder %s12, 0
      %p114 = por %p112, %p113
      %p115 = scmp.ne.s32.totalorder %s104, %s107
      %p116 = scmp.eq.s32.totalorder %s17, 1
      %p117 = por %p115, %p116
      %p118 = scmp.ne.s32.totalorder %s107, %s108
      %p119 = scmp.eq.s32.totalorder %s17, 0
      %p120 = por %p118, %p119
      %p121 = scmp.ne.s32.totalorder %s107, %s108
      %p122 = scmp.eq.s32.totalorder %s18, 1
      %p123 = por %p121, %p122
      %p125 = scmp.ne.s32.totalorder %s108, %s124
      %p126 = scmp.eq.s32.totalorder %s18, 0
      %p127 = por %p125, %p126
      %p128 = scmp.le.s32.totalorder 1, %s12
      %p129 = scmp.lt.s32.totalorder %s12, 3
      %p130 = pnand %p128, %p129
      %p131 = pneg %p130
      // Predicated region
      $region9: #{tpu_custom_call.1} parent=5 // pred_check
        _
      $region10: #{tpu_custom_call.1} parent=5 // pred_check_branch
        %133 = sbr.rel (%p130) target = $region12
      $region11: #{tpu_custom_call.1} parent=5 // pred_region
        %s134 = ssub.s32 %s12, 1
        // Predicated region
        $region13: #{tpu_custom_call.1} parent=11 // pred_check
          %p135 = pneg %p71
        $region14: #{tpu_custom_call.1} parent=11 // pred_check_branch
          %137 = sbr.rel (%p135) target = $region16
        $region15: #{tpu_custom_call.1} parent=11 // pred_region
          _
        $region16: #{tpu_custom_call.1} parent=11 // pred_fallthru
          _
        // Predicated region
        $region17: #{tpu_custom_call.1} parent=11 // pred_check
          %p138 = pneg %p92
        $region18: #{tpu_custom_call.1} parent=11 // pred_check_branch
          %140 = sbr.rel (%p138) target = $region20
        $region19: #{tpu_custom_call.1} parent=11 // pred_region
          _
        $region20: #{tpu_custom_call.1} parent=11 // pred_fallthru
          _
      $region12: #{tpu_custom_call.1} parent=5 // pred_fallthru
        _
      %p141 = scmp.lt.s32.totalorder %s12, 2
      // Predicated region
      $region21: #{tpu_custom_call.1} parent=5 // pred_check
        %p142 = pneg %p141
      $region22: #{tpu_custom_call.1} parent=5 // pred_check_branch
        %144 = sbr.rel (%p142) target = $region24
      $region23: #{tpu_custom_call.1} parent=5 // pred_region
        // Predicated region
        $region25: #{tpu_custom_call.1} parent=23 // pred_check
          %p145 = pneg %p44
        $region26: #{tpu_custom_call.1} parent=23 // pred_check_branch
          %147 = sbr.rel (%p145) target = $region28
        $region27: #{tpu_custom_call.1} parent=23 // pred_region
          %p148 = scmp.lt.s32.totalorder %s19, 1
          %s149 = scalar_select %p148, %s19, 1
          %s150 = smul.addr %s149, 20
          %s151 = smul.addr %s150, 8
          %s152 = scalar_lea.vmem %s0, %s151
        $region28: #{tpu_custom_call.1} parent=23 // pred_fallthru
          _
      $region24: #{tpu_custom_call.1} parent=5 // pred_fallthru
        _
      %p153 = scmp.le.s32.totalorder 1, %s12
      %p154 = scmp.lt.s32.totalorder %s12, 3
      %p155 = pnand %p153, %p154
      %p156 = pneg %p155
      // Predicated region
      $region29: #{tpu_custom_call.1} parent=5 // pred_check
        _
      $region30: #{tpu_custom_call.1} parent=5 // pred_check_branch
        %158 = sbr.rel (%p155) target = $region32
      $region31: #{tpu_custom_call.1} parent=5 // pred_region
        %s159 = ssub.s32 %s12, 1
        %p160 = scmp.lt.s32.totalorder %s21, 1
        %s161 = scalar_select %p160, %s21, 1
        %s162 = smul.addr %s161, 20
        %s163 = smul.addr %s162, 8
        %s164 = scalar_lea.vmem %s0, %s163
        %p165 = pneg %p50
        %p166 = pneg %p47
        %p167 = pneg %p71
        %p168 = pneg %p68
        %p169 = pneg %p92
        %p170 = pneg %p89
        %p171 = pneg %p120
        %p172 = pneg %p117
        %s173 = sand.u32 %s107, 1
        %s174 = scalar_lea.sflag [#allocation3], %s173
        %s175 = sand.u32 %s107, 1
        %s176 = smul.addr %s175, 64
        %s177 = scalar_lea.vmem [#allocation2], %s176
        %p178 = scmp.lt.s32.totalorder %s21, 1
        %s179 = scalar_select %p178, %s21, 1
        %s180 = smul.addr %s179, 20
        %s181 = smul.addr %s180, 8
        %s182 = scalar_lea.vmem %s0, %s181
        %s183 = smul.u32 %s22, 8
        %s184 = smul.u32 %s183, 16
        %s185 = scalar_lea.vmem %s182, %s184
        %v186 = vld [vmem:[%s185] sm:$0xff]
        %v187 = vld [vmem:[%s185 + $0x10] sm:$0xff]
        %v188 = vld [vmem:[%s185 + $0x20] sm:$0xff]
        %v189 = vld [vmem:[%s185 + $0x30] sm:$0xff]
        %v190 = vld [vmem:[%s185 + $0x40] sm:$0xff]
        %v191 = vld [vmem:[%s185 + $0x50] sm:$0xff]
        %v192 = vld [vmem:[%s185 + $0x60] sm:$0xff]
        %v193 = vld [vmem:[%s185 + $0x70] sm:$0xff]
        %v194 = vld [vmem:[%s1] sm:$0xff]
        %v195 = vld [vmem:[%s1 + $0x8] sm:$0xff]
        %v196 = vld [vmem:[%s1 + $0x10] sm:$0xff]
        %v197 = vld [vmem:[%s1 + $0x18] sm:$0xff]
        %v198 = vld [vmem:[%s1 + $0x20] sm:$0xff]
        %v199 = vld [vmem:[%s185 + $0x1] sm:$0xff]
        %v200 = vld [vmem:[%s185 + $0x11] sm:$0xff]
        %v201 = vld [vmem:[%s185 + $0x21] sm:$0xff]
        %v202 = vld [vmem:[%s185 + $0x31] sm:$0xff]
        %v203 = vld [vmem:[%s185 + $0x41] sm:$0xff]
        %v204 = vld [vmem:[%s185 + $0x51] sm:$0xff]
        %v205 = vld [vmem:[%s185 + $0x61] sm:$0xff]
        %v206 = vld [vmem:[%s185 + $0x71] sm:$0xff]
        %s207 = scalar_lea.vmem %s1, 40
        %v208 = vld [vmem:[%s207] sm:$0xff]
        %v209 = vld [vmem:[%s207 + $0x8] sm:$0xff]
        %v210 = vld [vmem:[%s207 + $0x10] sm:$0xff]
        %v211 = vld [vmem:[%s207 + $0x18] sm:$0xff]
        %v212 = vld [vmem:[%s207 + $0x20] sm:$0xff]
        %vm213 = vcmask 326656
        %v215 = vsel %vm213, %v199, 0
        %v218 = vsel %vm213, %v200, 0
        %v221 = vsel %vm213, %v201, 0
        %v224 = vsel %vm213, %v202, 0
        %v227 = vsel %vm213, %v203, 0
        %v230 = vsel %vm213, %v204, 0
        %v233 = vsel %vm213, %v205, 0
        %v236 = vsel %vm213, %v206, 0
        %238 = vmatprep.subr.mxu0 0.0
        %239 = vmatpush1.msra.mxu0 %v208
        %240 = vmatprep.subr.mxu0 0.0
        %241 = vmatpush1.msra.mxu0 %v209
        %242 = vmatprep.subr.mxu0 0.0
        %243 = vmatpush1.msra.mxu0 %v210
        %244 = vmatprep.subr.mxu0 0.0
        %245 = vmatpush1.msra.mxu0 %v211
        %246 = vmatprep.subr.mxu0 0.0
        %247 = vmatpush1.msra.mxu0 %v212
        %248 = vmatprep.subr.mxu0 0.0
        %249 = vmatpush1.msra.mxu0 0.0
        %250 = vmatprep.subr.mxu0 0.0
        %251 = vmatpush1.msra.mxu0 0.0
        %252 = vmatprep.subr.mxu0 0.0
        %253 = vmatpush1.msra.mxu0 0.0
        %254 = vmatprep.subr.mxu0 0.0
        %255 = vmatpush1.msra.mxu0 0.0
        %256 = vmatprep.subr.mxu0 0.0
        %257 = vmatpush1.msra.mxu0 0.0
        %258 = vmatprep.subr.mxu0 0.0
        %259 = vmatpush1.msra.mxu0 0.0
        %260 = vmatprep.subr.mxu0 0.0
        %261 = vmatpush1.msra.mxu0 0.0
        %262 = vmatprep.subr.mxu0 0.0
        %263 = vmatpush1.msra.mxu0 0.0
        %264 = vmatprep.subr.mxu0 0.0
        %265 = vmatpush1.msra.mxu0 0.0
        %266 = vmatprep.subr.mxu0 0.0
        %267 = vmatpush1.msra.mxu0 0.0
        %268 = vmatprep.subr.mxu0 0.0
        %269 = vmatpush1.msra.mxu0 0.0
        %270 = vmatprep.subr.mxu0 0.0
        %271 = vmatpush1.msra.mxu0 0.0
        %272 = vmatprep.subr.mxu0 0.0
        %273 = vmatpush1.msra.mxu0 0.0
        %274 = vmatprep.subr.mxu0 0.0
        %275 = vmatpush1.msra.mxu0 0.0
        %276 = vmatprep.subr.mxu0 0.0
        %277 = vmatpush1.msra.mxu0 0.0
        %278 = vmatprep.subr.mxu0 0.0
        %279 = vmatpush1.msra.mxu0 0.0
        %280 = vmatprep.subr.mxu0 0.0
        %281 = vmatpush1.msra.mxu0 0.0
        %282 = vmatprep.subr.mxu0 0.0
        %283 = vmatpush1.msra.mxu0 0.0
        %284 = vmatprep.subr.mxu0 0.0
        %285 = vmatpush1.msra.mxu0 0.0
        %286 = vmatprep.subr.mxu0 0.0
        %287 = vmatpush1.msra.mxu0 0.0
        %288 = vmatprep.subr.mxu0 0.0
        %289 = vmatpush1.msra.mxu0 0.0
        %290 = vmatprep.subr.mxu0 0.0
        %291 = vmatpush1.msra.mxu0 0.0
        %292 = vmatprep.subr.mxu0 0.0
        %293 = vmatpush1.msra.mxu0 0.0
        %294 = vmatprep.subr.mxu0 0.0
        %295 = vmatpush1.msra.mxu0 0.0
        %296 = vmatprep.subr.mxu0 0.0
        %297 = vmatpush1.msra.mxu0 0.0
        %298 = vmatprep.subr.mxu0 0.0
        %299 = vmatpush1.msra.mxu0 0.0
        %300 = vmatprep.subr.mxu0 0.0
        %301 = vmatpush1.msra.mxu0 0.0
        %302 = vmatprep.mubr.f32.mxu0 0.0
        %303 = vmatmul.mubr.f32.gmra.mrb[0].mxu0 %v215
        %v304 = vpop.f32.mrb[0].mxu0
        %v305 = vadd.f32 0.0, %v304
        %v306 = vpop.f32.mrb[0].mxu0
        %307 = vmatprep.mubr.f32.mxu0 0.0
        %308 = vmatmul.mubr.f32.gmra.mrb[0].mxu0 %v218
        %v309 = vpop.f32.mrb[0].mxu0
        %v310 = vadd.f32 0.0, %v309
        %v311 = vpop.f32.mrb[0].mxu0
        %312 = vmatprep.mubr.f32.mxu0 0.0
        %313 = vmatmul.mubr.f32.gmra.mrb[0].mxu0 %v221
        %v314 = vpop.f32.mrb[0].mxu0
        %v315 = vadd.f32 0.0, %v314
        %v316 = vpop.f32.mrb[0].mxu0
        %317 = vmatprep.mubr.f32.mxu0 0.0
        %318 = vmatmul.mubr.f32.gmra.mrb[0].mxu0 %v224
        %v319 = vpop.f32.mrb[0].mxu0
        %v320 = vadd.f32 0.0, %v319
        %v321 = vpop.f32.mrb[0].mxu0
        %322 = vmatprep.mubr.f32.mxu0 0.0
        %323 = vmatmul.mubr.f32.gmra.mrb[0].mxu0 %v227
        %v324 = vpop.f32.mrb[0].mxu0
        %v325 = vadd.f32 0.0, %v324
        %v326 = vpop.f32.mrb[0].mxu0
        %327 = vmatprep.mubr.f32.mxu0 0.0
        %328 = vmatmul.mubr.f32.gmra.mrb[0].mxu0 %v230
        %v329 = vpop.f32.mrb[0].mxu0
        %v330 = vadd.f32 0.0, %v329
        %v331 = vpop.f32.mrb[0].mxu0
        %332 = vmatprep.mubr.f32.mxu0 0.0
        %333 = vmatmul.mubr.f32.gmra.mrb[0].mxu0 %v233
        %v334 = vpop.f32.mrb[0].mxu0
        %v335 = vadd.f32 0.0, %v334
        %v336 = vpop.f32.mrb[0].mxu0
        %337 = vmatprep.mubr.f32.mxu0 0.0
        %338 = vmatmul.mubr.f32.gmra.mrb[0].mxu0 %v236
        %v339 = vpop.f32.mrb[0].mxu0
        %v340 = vadd.f32 0.0, %v339
        %v341 = vpop.f32.mrb[0].mxu0
        %342 = vdwg.mxu0
        %v344 = vsel %vm213, %v186, 0
        %v347 = vsel %vm213, %v187, 0
        %v350 = vsel %vm213, %v188, 0
        %v353 = vsel %vm213, %v189, 0
        %v356 = vsel %vm213, %v190, 0
        %v359 = vsel %vm213, %v191, 0
        %v362 = vsel %vm213, %v192, 0
        %v365 = vsel %vm213, %v193, 0
        %367 = vmatprep.subr.mxu0 0.0
        %368 = vmatpush1.msra.mxu0 %v194
        %369 = vmatprep.subr.mxu0 0.0
        %370 = vmatpush1.msra.mxu0 %v195
        %371 = vmatprep.subr.mxu0 0.0
        %372 = vmatpush1.msra.mxu0 %v196
        %373 = vmatprep.subr.mxu0 0.0
        %374 = vmatpush1.msra.mxu0 %v197
        %375 = vmatprep.subr.mxu0 0.0
        %376 = vmatpush1.msra.mxu0 %v198
        %377 = vmatprep.subr.mxu0 0.0
        %378 = vmatpush1.msra.mxu0 0.0
        %379 = vmatprep.subr.mxu0 0.0
        %380 = vmatpush1.msra.mxu0 0.0
        %381 = vmatprep.subr.mxu0 0.0
        %382 = vmatpush1.msra.mxu0 0.0
        %383 = vmatprep.subr.mxu0 0.0
        %384 = vmatpush1.msra.mxu0 0.0
        %385 = vmatprep.subr.mxu0 0.0
        %386 = vmatpush1.msra.mxu0 0.0
        %387 = vmatprep.subr.mxu0 0.0
        %388 = vmatpush1.msra.mxu0 0.0
        %389 = vmatprep.subr.mxu0 0.0
        %390 = vmatpush1.msra.mxu0 0.0
        %391 = vmatprep.subr.mxu0 0.0
        %392 = vmatpush1.msra.mxu0 0.0
        %393 = vmatprep.subr.mxu0 0.0
        %394 = vmatpush1.msra.mxu0 0.0
        %395 = vmatprep.subr.mxu0 0.0
        %396 = vmatpush1.msra.mxu0 0.0
        %397 = vmatprep.subr.mxu0 0.0
        %398 = vmatpush1.msra.mxu0 0.0
        %399 = vmatprep.subr.mxu0 0.0
        %400 = vmatpush1.msra.mxu0 0.0
        %401 = vmatprep.subr.mxu0 0.0
        %402 = vmatpush1.msra.mxu0 0.0
        %403 = vmatprep.subr.mxu0 0.0
        %404 = vmatpush1.msra.mxu0 0.0
        %405 = vmatprep.subr.mxu0 0.0
        %406 = vmatpush1.msra.mxu0 0.0
        %407 = vmatprep.subr.mxu0 0.0
        %408 = vmatpush1.msra.mxu0 0.0
        %409 = vmatprep.subr.mxu0 0.0
        %410 = vmatpush1.msra.mxu0 0.0
        %411 = vmatprep.subr.mxu0 0.0
        %412 = vmatpush1.msra.mxu0 0.0
        %413 = vmatprep.subr.mxu0 0.0
        %414 = vmatpush1.msra.mxu0 0.0
        %415 = vmatprep.subr.mxu0 0.0
        %416 = vmatpush1.msra.mxu0 0.0
        %417 = vmatprep.subr.mxu0 0.0
        %418 = vmatpush1.msra.mxu0 0.0
        %419 = vmatprep.subr.mxu0 0.0
        %420 = vmatpush1.msra.mxu0 0.0
        %421 = vmatprep.subr.mxu0 0.0
        %422 = vmatpush1.msra.mxu0 0.0
        %423 = vmatprep.subr.mxu0 0.0
        %424 = vmatpush1.msra.mxu0 0.0
        %425 = vmatprep.subr.mxu0 0.0
        %426 = vmatpush1.msra.mxu0 0.0
        %427 = vmatprep.subr.mxu0 0.0
        %428 = vmatpush1.msra.mxu0 0.0
        %429 = vmatprep.subr.mxu0 0.0
        %430 = vmatpush1.msra.mxu0 0.0
        %431 = vmatprep.mubr.f32.mxu0 0.0
        %432 = vmatmul.mubr.f32.gmra.mrb[0].mxu0 %v344
        %v433 = vpop.f32.mrb[0].mxu0
        %v434 = vadd.f32 %v305, %v433
        %v435 = vpop.f32.mrb[0].mxu0
        %436 = vmatprep.mubr.f32.mxu0 0.0
        %437 = vmatmul.mubr.f32.gmra.mrb[0].mxu0 %v347
        %v438 = vpop.f32.mrb[0].mxu0
        %v439 = vadd.f32 %v310, %v438
        %v440 = vpop.f32.mrb[0].mxu0
        %441 = vmatprep.mubr.f32.mxu0 0.0
        %442 = vmatmul.mubr.f32.gmra.mrb[0].mxu0 %v350
        %v443 = vpop.f32.mrb[0].mxu0
        %v444 = vadd.f32 %v315, %v443
        %v445 = vpop.f32.mrb[0].mxu0
        %446 = vmatprep.mubr.f32.mxu0 0.0
        %447 = vmatmul.mubr.f32.gmra.mrb[0].mxu0 %v353
        %v448 = vpop.f32.mrb[0].mxu0
        %v449 = vadd.f32 %v320, %v448
        %v450 = vpop.f32.mrb[0].mxu0
        %451 = vmatprep.mubr.f32.mxu0 0.0
        %452 = vmatmul.mubr.f32.gmra.mrb[0].mxu0 %v356
        %v453 = vpop.f32.mrb[0].mxu0
        %v454 = vadd.f32 %v325, %v453
        %v455 = vpop.f32.mrb[0].mxu0
        %456 = vmatprep.mubr.f32.mxu0 0.0
        %457 = vmatmul.mubr.f32.gmra.mrb[0].mxu0 %v359
        %v458 = vpop.f32.mrb[0].mxu0
        %v459 = vadd.f32 %v330, %v458
        %v460 = vpop.f32.mrb[0].mxu0
        %461 = vmatprep.mubr.f32.mxu0 0.0
        %462 = vmatmul.mubr.f32.gmra.mrb[0].mxu0 %v362
        %v463 = vpop.f32.mrb[0].mxu0
        %v464 = vadd.f32 %v335, %v463
        %v465 = vpop.f32.mrb[0].mxu0
        %466 = vmatprep.mubr.f32.mxu0 0.0
        %467 = vmatmul.mubr.f32.gmra.mrb[0].mxu0 %v365
        %v468 = vpop.f32.mrb[0].mxu0
        %v469 = vadd.f32 %v340, %v468
        %v470 = vpop.f32.mrb[0].mxu0
        %471 = vdwg.mxu0
        %v472 = vld [vmem:[%s185 + $0x2] sm:$0xff]
        %v473 = vld [vmem:[%s185 + $0x12] sm:$0xff]
        %v474 = vld [vmem:[%s185 + $0x22] sm:$0xff]
        %v475 = vld [vmem:[%s185 + $0x32] sm:$0xff]
        %v476 = vld [vmem:[%s185 + $0x42] sm:$0xff]
        %v477 = vld [vmem:[%s185 + $0x52] sm:$0xff]
        %v478 = vld [vmem:[%s185 + $0x62] sm:$0xff]
        %v479 = vld [vmem:[%s185 + $0x72] sm:$0xff]
        %s480 = scalar_lea.vmem %s1, 80
        %v481 = vld [vmem:[%s480] sm:$0xff]
        %v482 = vld [vmem:[%s480 + $0x8] sm:$0xff]
        %v483 = vld [vmem:[%s480 + $0x10] sm:$0xff]
        %v484 = vld [vmem:[%s480 + $0x18] sm:$0xff]
        %v485 = vld [vmem:[%s480 + $0x20] sm:$0xff]
        %v487 = vsel %vm213, %v472, 0
        %v490 = vsel %vm213, %v473, 0
        %v493 = vsel %vm213, %v474, 0
        %v496 = vsel %vm213, %v475, 0
        %v499 = vsel %vm213, %v476, 0
        %v502 = vsel %vm213, %v477, 0
        %v505 = vsel %vm213, %v478, 0
        %v508 = vsel %vm213, %v479, 0
        %510 = vmatprep.subr.mxu0 0.0
        %511 = vmatpush1.msra.mxu0 %v481
        %512 = vmatprep.subr.mxu0 0.0
        %513 = vmatpush1.msra.mxu0 %v482
        %514 = vmatprep.subr.mxu0 0.0
        %515 = vmatpush1.msra.mxu0 %v483
        %516 = vmatprep.subr.mxu0 0.0
        %517 = vmatpush1.msra.mxu0 %v484
        %518 = vmatprep.subr.mxu0 0.0
        %519 = vmatpush1.msra.mxu0 %v485
        %520 = vmatprep.subr.mxu0 0.0
        %521 = vmatpush1.msra.mxu0 0.0
        %522 = vmatprep.subr.mxu0 0.0
        %523 = vmatpush1.msra.mxu0 0.0
        %524 = vmatprep.subr.mxu0 0.0
        %525 = vmatpush1.msra.mxu0 0.0
        %526 = vmatprep.subr.mxu0 0.0
        %527 = vmatpush1.msra.mxu0 0.0
        %528 = vmatprep.subr.mxu0 0.0
        %529 = vmatpush1.msra.mxu0 0.0
        %530 = vmatprep.subr.mxu0 0.0
        %531 = vmatpush1.msra.mxu0 0.0
        %532 = vmatprep.subr.mxu0 0.0
        %533 = vmatpush1.msra.mxu0 0.0
        %534 = vmatprep.subr.mxu0 0.0
        %535 = vmatpush1.msra.mxu0 0.0
        %536 = vmatprep.subr.mxu0 0.0
        %537 = vmatpush1.msra.mxu0 0.0
        %538 = vmatprep.subr.mxu0 0.0
        %539 = vmatpush1.msra.mxu0 0.0
        %540 = vmatprep.subr.mxu0 0.0
        %541 = vmatpush1.msra.mxu0 0.0
        %542 = vmatprep.subr.mxu0 0.0
        %543 = vmatpush1.msra.mxu0 0.0
        %544 = vmatprep.subr.mxu0 0.0
        %545 = vmatpush1.msra.mxu0 0.0
        %546 = vmatprep.subr.mxu0 0.0
        %547 = vmatpush1.msra.mxu0 0.0
        %548 = vmatprep.subr.mxu0 0.0
        %549 = vmatpush1.msra.mxu0 0.0
        %550 = vmatprep.subr.mxu0 0.0
        %551 = vmatpush1.msra.mxu0 0.0
        %552 = vmatprep.subr.mxu0 0.0
        %553 = vmatpush1.msra.mxu0 0.0
        %554 = vmatprep.subr.mxu0 0.0
        %555 = vmatpush1.msra.mxu0 0.0
        %556 = vmatprep.subr.mxu0 0.0
        %557 = vmatpush1.msra.mxu0 0.0
        %558 = vmatprep.subr.mxu0 0.0
        %559 = vmatpush1.msra.mxu0 0.0
        %560 = vmatprep.subr.mxu0 0.0
        %561 = vmatpush1.msra.mxu0 0.0
        %562 = vmatprep.subr.mxu0 0.0
        %563 = vmatpush1.msra.mxu0 0.0
        %564 = vmatprep.subr.mxu0 0.0
        %565 = vmatpush1.msra.mxu0 0.0
        %566 = vmatprep.subr.mxu0 0.0
        %567 = vmatpush1.msra.mxu0 0.0
        %568 = vmatprep.subr.mxu0 0.0
        %569 = vmatpush1.msra.mxu0 0.0
        %570 = vmatprep.subr.mxu0 0.0
        %571 = vmatpush1.msra.mxu0 0.0
        %572 = vmatprep.subr.mxu0 0.0
        %573 = vmatpush1.msra.mxu0 0.0
        %574 = vmatprep.mubr.f32.mxu0 0.0
        %575 = vmatmul.mubr.f32.gmra.mrb[0].mxu0 %v487
        %v576 = vpop.f32.mrb[0].mxu0
        %v577 = vadd.f32 0.0, %v576
        %v578 = vpop.f32.mrb[0].mxu0
        %579 = vmatprep.mubr.f32.mxu0 0.0
        %580 = vmatmul.mubr.f32.gmra.mrb[0].mxu0 %v490
        %v581 = vpop.f32.mrb[0].mxu0
        %v582 = vadd.f32 0.0, %v581
        %v583 = vpop.f32.mrb[0].mxu0
        %584 = vmatprep.mubr.f32.mxu0 0.0
        %585 = vmatmul.mubr.f32.gmra.mrb[0].mxu0 %v493
        %v586 = vpop.f32.mrb[0].mxu0
        %v587 = vadd.f32 0.0, %v586
        %v588 = vpop.f32.mrb[0].mxu0
        %589 = vmatprep.mubr.f32.mxu0 0.0
        %590 = vmatmul.mubr.f32.gmra.mrb[0].mxu0 %v496
        %v591 = vpop.f32.mrb[0].mxu0
        %v592 = vadd.f32 0.0, %v591
        %v593 = vpop.f32.mrb[0].mxu0
        %594 = vmatprep.mubr.f32.mxu0 0.0
        %595 = vmatmul.mubr.f32.gmra.mrb[0].mxu0 %v499
        %v596 = vpop.f32.mrb[0].mxu0
        %v597 = vadd.f32 0.0, %v596
        %v598 = vpop.f32.mrb[0].mxu0
        %599 = vmatprep.mubr.f32.mxu0 0.0
        %600 = vmatmul.mubr.f32.gmra.mrb[0].mxu0 %v502
        %v601 = vpop.f32.mrb[0].mxu0
        %v602 = vadd.f32 0.0, %v601
        %v603 = vpop.f32.mrb[0].mxu0
        %604 = vmatprep.mubr.f32.mxu0 0.0
        %605 = vmatmul.mubr.f32.gmra.mrb[0].mxu0 %v505
        %v606 = vpop.f32.mrb[0].mxu0
        %v607 = vadd.f32 0.0, %v606
        %v608 = vpop.f32.mrb[0].mxu0
        %609 = vmatprep.mubr.f32.mxu0 0.0
        %610 = vmatmul.mubr.f32.gmra.mrb[0].mxu0 %v508
        %v611 = vpop.f32.mrb[0].mxu0
        %v612 = vadd.f32 0.0, %v611
        %v613 = vpop.f32.mrb[0].mxu0
        %614 = vdwg.mxu0
        %v615 = vadd.f32 %v434, %v577
        %v616 = vadd.f32 %v439, %v582
        %v617 = vadd.f32 %v444, %v587
        %v618 = vadd.f32 %v449, %v592
        %v619 = vadd.f32 %v454, %v597
        %v620 = vadd.f32 %v459, %v602
        %v621 = vadd.f32 %v464, %v607
        %v622 = vadd.f32 %v469, %v612
        %s623 = sadd.s32 %s183, 1
        %s624 = smul.u32 %s623, 16
        %s625 = scalar_lea.vmem %s182, %s624
        %v626 = vld [vmem:[%s625] sm:$0xff]
        %v627 = vld [vmem:[%s625 + $0x10] sm:$0xff]
        %v628 = vld [vmem:[%s625 + $0x20] sm:$0xff]
        %v629 = vld [vmem:[%s625 + $0x30] sm:$0xff]
        %v630 = vld [vmem:[%s625 + $0x40] sm:$0xff]
        %v631 = vld [vmem:[%s625 + $0x50] sm:$0xff]
        %v632 = vld [vmem:[%s625 + $0x60] sm:$0xff]
        %v633 = vld [vmem:[%s625 + $0x70] sm:$0xff]
        %s634 = scalar_lea.vmem %s1, 120
        %v635 = vld [vmem:[%s634] sm:$0xff]
        %v636 = vld [vmem:[%s634 + $0x8] sm:$0xff]
        %v637 = vld [vmem:[%s634 + $0x10] sm:$0xff]
        %v638 = vld [vmem:[%s634 + $0x18] sm:$0xff]
        %v639 = vld [vmem:[%s634 + $0x20] sm:$0xff]
        %v641 = vsel %vm213, %v626, 0
        %v644 = vsel %vm213, %v627, 0
        %v647 = vsel %vm213, %v628, 0
        %v650 = vsel %vm213, %v629, 0
        %v653 = vsel %vm213, %v630, 0
        %v656 = vsel %vm213, %v631, 0
        %v659 = vsel %vm213, %v632, 0
        %v662 = vsel %vm213, %v633, 0
        %664 = vmatprep.subr.mxu0 0.0
        %665 = vmatpush1.msra.mxu0 %v635
        %666 = vmatprep.subr.mxu0 0.0
        %667 = vmatpush1.msra.mxu0 %v636
        %668 = vmatprep.subr.mxu0 0.0
        %669 = vmatpush1.msra.mxu0 %v637
        %670 = vmatprep.subr.mxu0 0.0
        %671 = vmatpush1.msra.mxu0 %v638
        %672 = vmatprep.subr.mxu0 0.0
        %673 = vmatpush1.msra.mxu0 %v639
        %674 = vmatprep.subr.mxu0 0.0
        %675 = vmatpush1.msra.mxu0 0.0
        %676 = vmatprep.subr.mxu0 0.0
        %677 = vmatpush1.msra.mxu0 0.0
        %678 = vmatprep.subr.mxu0 0.0
        %679 = vmatpush1.msra.mxu0 0.0
        %680 = vmatprep.subr.mxu0 0.0
        %681 = vmatpush1.msra.mxu0 0.0
        %682 = vmatprep.subr.mxu0 0.0
        %683 = vmatpush1.msra.mxu0 0.0
        %684 = vmatprep.subr.mxu0 0.0
        %685 = vmatpush1.msra.mxu0 0.0
        %686 = vmatprep.subr.mxu0 0.0
        %687 = vmatpush1.msra.mxu0 0.0
        %688 = vmatprep.subr.mxu0 0.0
        %689 = vmatpush1.msra.mxu0 0.0
        %690 = vmatprep.subr.mxu0 0.0
        %691 = vmatpush1.msra.mxu0 0.0
        %692 = vmatprep.subr.mxu0 0.0
        %693 = vmatpush1.msra.mxu0 0.0
        %694 = vmatprep.subr.mxu0 0.0
        %695 = vmatpush1.msra.mxu0 0.0
        %696 = vmatprep.subr.mxu0 0.0
        %697 = vmatpush1.msra.mxu0 0.0
        %698 = vmatprep.subr.mxu0 0.0
        %699 = vmatpush1.msra.mxu0 0.0
        %700 = vmatprep.subr.mxu0 0.0
        %701 = vmatpush1.msra.mxu0 0.0
        %702 = vmatprep.subr.mxu0 0.0
        %703 = vmatpush1.msra.mxu0 0.0
        %704 = vmatprep.subr.mxu0 0.0
        %705 = vmatpush1.msra.mxu0 0.0
        %706 = vmatprep.subr.mxu0 0.0
        %707 = vmatpush1.msra.mxu0 0.0
        %708 = vmatprep.subr.mxu0 0.0
        %709 = vmatpush1.msra.mxu0 0.0
        %710 = vmatprep.subr.mxu0 0.0
        %711 = vmatpush1.msra.mxu0 0.0
        %712 = vmatprep.subr.mxu0 0.0
        %713 = vmatpush1.msra.mxu0 0.0
        %714 = vmatprep.subr.mxu0 0.0
        %715 = vmatpush1.msra.mxu0 0.0
        %716 = vmatprep.subr.mxu0 0.0
        %717 = vmatpush1.msra.mxu0 0.0
        %718 = vmatprep.subr.mxu0 0.0
        %719 = vmatpush1.msra.mxu0 0.0
        %720 = vmatprep.subr.mxu0 0.0
        %721 = vmatpush1.msra.mxu0 0.0
        %722 = vmatprep.subr.mxu0 0.0
        %723 = vmatpush1.msra.mxu0 0.0
        %724 = vmatprep.subr.mxu0 0.0
        %725 = vmatpush1.msra.mxu0 0.0
        %726 = vmatprep.subr.mxu0 0.0
        %727 = vmatpush1.msra.mxu0 0.0
        %728 = vmatprep.mubr.f32.mxu0 0.0
        %729 = vmatmul.mubr.f32.gmra.mrb[0].mxu0 %v641
        %v730 = vpop.f32.mrb[0].mxu0
        %v731 = vadd.f32 0.0, %v730
        %v732 = vpop.f32.mrb[0].mxu0
        %733 = vmatprep.mubr.f32.mxu0 0.0
        %734 = vmatmul.mubr.f32.gmra.mrb[0].mxu0 %v644
        %v735 = vpop.f32.mrb[0].mxu0
        %v736 = vadd.f32 0.0, %v735
        %v737 = vpop.f32.mrb[0].mxu0
        %738 = vmatprep.mubr.f32.mxu0 0.0
        %739 = vmatmul.mubr.f32.gmra.mrb[0].mxu0 %v647
        %v740 = vpop.f32.mrb[0].mxu0
        %v741 = vadd.f32 0.0, %v740
        %v742 = vpop.f32.mrb[0].mxu0
        %743 = vmatprep.mubr.f32.mxu0 0.0
        %744 = vmatmul.mubr.f32.gmra.mrb[0].mxu0 %v650
        %v745 = vpop.f32.mrb[0].mxu0
        %v746 = vadd.f32 0.0, %v745
        %v747 = vpop.f32.mrb[0].mxu0
        %748 = vmatprep.mubr.f32.mxu0 0.0
        %749 = vmatmul.mubr.f32.gmra.mrb[0].mxu0 %v653
        %v750 = vpop.f32.mrb[0].mxu0
        %v751 = vadd.f32 0.0, %v750
        %v752 = vpop.f32.mrb[0].mxu0
        %753 = vmatprep.mubr.f32.mxu0 0.0
        %754 = vmatmul.mubr.f32.gmra.mrb[0].mxu0 %v656
        %v755 = vpop.f32.mrb[0].mxu0
        %v756 = vadd.f32 0.0, %v755
        %v757 = vpop.f32.mrb[0].mxu0
        %758 = vmatprep.mubr.f32.mxu0 0.0
        %759 = vmatmul.mubr.f32.gmra.mrb[0].mxu0 %v659
        %v760 = vpop.f32.mrb[0].mxu0
        %v761 = vadd.f32 0.0, %v760
        %v762 = vpop.f32.mrb[0].mxu0
        %763 = vmatprep.mubr.f32.mxu0 0.0
        %764 = vmatmul.mubr.f32.gmra.mrb[0].mxu0 %v662
        %v765 = vpop.f32.mrb[0].mxu0
        %v766 = vadd.f32 0.0, %v765
        %v767 = vpop.f32.mrb[0].mxu0
        %768 = vdwg.mxu0
        %v769 = vadd.f32 %v615, %v731
        %v770 = vadd.f32 %v616, %v736
        %v771 = vadd.f32 %v617, %v741
        %v772 = vadd.f32 %v618, %v746
        %v773 = vadd.f32 %v619, %v751
        %v774 = vadd.f32 %v620, %v756
        %v775 = vadd.f32 %v621, %v761
        %v776 = vadd.f32 %v622, %v766
        %v777 = vld [vmem:[%s625 + $0x1] sm:$0xff]
        %v778 = vld [vmem:[%s625 + $0x11] sm:$0xff]
        %v779 = vld [vmem:[%s625 + $0x21] sm:$0xff]
        %v780 = vld [vmem:[%s625 + $0x31] sm:$0xff]
        %v781 = vld [vmem:[%s625 + $0x41] sm:$0xff]
        %v782 = vld [vmem:[%s625 + $0x51] sm:$0xff]
        %v783 = vld [vmem:[%s625 + $0x61] sm:$0xff]
        %v784 = vld [vmem:[%s625 + $0x71] sm:$0xff]
        %s785 = scalar_lea.vmem %s1, 160
        %v786 = vld [vmem:[%s785] sm:$0xff]
        %v787 = vld [vmem:[%s785 + $0x8] sm:$0xff]
        %v788 = vld [vmem:[%s785 + $0x10] sm:$0xff]
        %v789 = vld [vmem:[%s785 + $0x18] sm:$0xff]
        %v790 = vld [vmem:[%s785 + $0x20] sm:$0xff]
        %v792 = vsel %vm213, %v777, 0
        %v795 = vsel %vm213, %v778, 0
        %v798 = vsel %vm213, %v779, 0
        %v801 = vsel %vm213, %v780, 0
        %v804 = vsel %vm213, %v781, 0
        %v807 = vsel %vm213, %v782, 0
        %v810 = vsel %vm213, %v783, 0
        %v813 = vsel %vm213, %v784, 0
        %815 = vmatprep.subr.mxu0 0.0
        %816 = vmatpush1.msra.mxu0 %v786
        %817 = vmatprep.subr.mxu0 0.0
        %818 = vmatpush1.msra.mxu0 %v787
        %819 = vmatprep.subr.mxu0 0.0
        %820 = vmatpush1.msra.mxu0 %v788
        %821 = vmatprep.subr.mxu0 0.0
        %822 = vmatpush1.msra.mxu0 %v789
        %823 = vmatprep.subr.mxu0 0.0
        %824 = vmatpush1.msra.mxu0 %v790
        %825 = vmatprep.subr.mxu0 0.0
        %826 = vmatpush1.msra.mxu0 0.0
        %827 = vmatprep.subr.mxu0 0.0
        %828 = vmatpush1.msra.mxu0 0.0
        %829 = vmatprep.subr.mxu0 0.0
        %830 = vmatpush1.msra.mxu0 0.0
        %831 = vmatprep.subr.mxu0 0.0
        %832 = vmatpush1.msra.mxu0 0.0
        %833 = vmatprep.subr.mxu0 0.0
        %834 = vmatpush1.msra.mxu0 0.0
        %835 = vmatprep.subr.mxu0 0.0
        %836 = vmatpush1.msra.mxu0 0.0
        %837 = vmatprep.subr.mxu0 0.0
        %838 = vmatpush1.msra.mxu0 0.0
        %839 = vmatprep.subr.mxu0 0.0
        %840 = vmatpush1.msra.mxu0 0.0
        %841 = vmatprep.subr.mxu0 0.0
        %842 = vmatpush1.msra.mxu0 0.0
        %843 = vmatprep.subr.mxu0 0.0
        %844 = vmatpush1.msra.mxu0 0.0
        %845 = vmatprep.subr.mxu0 0.0
        %846 = vmatpush1.msra.mxu0 0.0
        %847 = vmatprep.subr.mxu0 0.0
        %848 = vmatpush1.msra.mxu0 0.0
        %849 = vmatprep.subr.mxu0 0.0
        %850 = vmatpush1.msra.mxu0 0.0
        %851 = vmatprep.subr.mxu0 0.0
        %852 = vmatpush1.msra.mxu0 0.0
        %853 = vmatprep.subr.mxu0 0.0
        %854 = vmatpush1.msra.mxu0 0.0
        %855 = vmatprep.subr.mxu0 0.0
        %856 = vmatpush1.msra.mxu0 0.0
        %857 = vmatprep.subr.mxu0 0.0
        %858 = vmatpush1.msra.mxu0 0.0
        %859 = vmatprep.subr.mxu0 0.0
        %860 = vmatpush1.msra.mxu0 0.0
        %861 = vmatprep.subr.mxu0 0.0
        %862 = vmatpush1.msra.mxu0 0.0
        %863 = vmatprep.subr.mxu0 0.0
        %864 = vmatpush1.msra.mxu0 0.0
        %865 = vmatprep.subr.mxu0 0.0
        %866 = vmatpush1.msra.mxu0 0.0
        %867 = vmatprep.subr.mxu0 0.0
        %868 = vmatpush1.msra.mxu0 0.0
        %869 = vmatprep.subr.mxu0 0.0
        %870 = vmatpush1.msra.mxu0 0.0
        %871 = vmatprep.subr.mxu0 0.0
        %872 = vmatpush1.msra.mxu0 0.0
        %873 = vmatprep.subr.mxu0 0.0
        %874 = vmatpush1.msra.mxu0 0.0
        %875 = vmatprep.subr.mxu0 0.0
        %876 = vmatpush1.msra.mxu0 0.0
        %877 = vmatprep.subr.mxu0 0.0
        %878 = vmatpush1.msra.mxu0 0.0
        %879 = vmatprep.mubr.f32.mxu0 0.0
        %880 = vmatmul.mubr.f32.gmra.mrb[0].mxu0 %v792
        %v881 = vpop.f32.mrb[0].mxu0
        %v882 = vadd.f32 0.0, %v881
        %v883 = vpop.f32.mrb[0].mxu0
        %884 = vmatprep.mubr.f32.mxu0 0.0
        %885 = vmatmul.mubr.f32.gmra.mrb[0].mxu0 %v795
        %v886 = vpop.f32.mrb[0].mxu0
        %v887 = vadd.f32 0.0, %v886
        %v888 = vpop.f32.mrb[0].mxu0
        %889 = vmatprep.mubr.f32.mxu0 0.0
        %890 = vmatmul.mubr.f32.gmra.mrb[0].mxu0 %v798
        %v891 = vpop.f32.mrb[0].mxu0
        %v892 = vadd.f32 0.0, %v891
        %v893 = vpop.f32.mrb[0].mxu0
        %894 = vmatprep.mubr.f32.mxu0 0.0
        %895 = vmatmul.mubr.f32.gmra.mrb[0].mxu0 %v801
        %v896 = vpop.f32.mrb[0].mxu0
        %v897 = vadd.f32 0.0, %v896
        %v898 = vpop.f32.mrb[0].mxu0
        %899 = vmatprep.mubr.f32.mxu0 0.0
        %900 = vmatmul.mubr.f32.gmra.mrb[0].mxu0 %v804
        %v901 = vpop.f32.mrb[0].mxu0
        %v902 = vadd.f32 0.0, %v901
        %v903 = vpop.f32.mrb[0].mxu0
        %904 = vmatprep.mubr.f32.mxu0 0.0
        %905 = vmatmul.mubr.f32.gmra.mrb[0].mxu0 %v807
        %v906 = vpop.f32.mrb[0].mxu0
        %v907 = vadd.f32 0.0, %v906
        %v908 = vpop.f32.mrb[0].mxu0
        %909 = vmatprep.mubr.f32.mxu0 0.0
        %910 = vmatmul.mubr.f32.gmra.mrb[0].mxu0 %v810
        %v911 = vpop.f32.mrb[0].mxu0
        %v912 = vadd.f32 0.0, %v911
        %v913 = vpop.f32.mrb[0].mxu0
        %914 = vmatprep.mubr.f32.mxu0 0.0
        %915 = vmatmul.mubr.f32.gmra.mrb[0].mxu0 %v813
        %v916 = vpop.f32.mrb[0].mxu0
        %v917 = vadd.f32 0.0, %v916
        %v918 = vpop.f32.mrb[0].mxu0
        %919 = vdwg.mxu0
        %v920 = vadd.f32 %v769, %v882
        %v921 = vadd.f32 %v770, %v887
        %v922 = vadd.f32 %v771, %v892
        %v923 = vadd.f32 %v772, %v897
        %v924 = vadd.f32 %v773, %v902
        %v925 = vadd.f32 %v774, %v907
        %v926 = vadd.f32 %v775, %v912
        %v927 = vadd.f32 %v776, %v917
        %v928 = vld [vmem:[%s625 + $0x2] sm:$0xff]
        %v929 = vld [vmem:[%s625 + $0x12] sm:$0xff]
        %v930 = vld [vmem:[%s625 + $0x22] sm:$0xff]
        %v931 = vld [vmem:[%s625 + $0x32] sm:$0xff]
        %v932 = vld [vmem:[%s625 + $0x42] sm:$0xff]
        %v933 = vld [vmem:[%s625 + $0x52] sm:$0xff]
        %v934 = vld [vmem:[%s625 + $0x62] sm:$0xff]
        %v935 = vld [vmem:[%s625 + $0x72] sm:$0xff]
        %s936 = scalar_lea.vmem %s1, 200
        %v937 = vld [vmem:[%s936] sm:$0xff]
        %v938 = vld [vmem:[%s936 + $0x8] sm:$0xff]
        %v939 = vld [vmem:[%s936 + $0x10] sm:$0xff]
        %v940 = vld [vmem:[%s936 + $0x18] sm:$0xff]
        %v941 = vld [vmem:[%s936 + $0x20] sm:$0xff]
        %v943 = vsel %vm213, %v928, 0
        %v946 = vsel %vm213, %v929, 0
        %v949 = vsel %vm213, %v930, 0
        %v952 = vsel %vm213, %v931, 0
        %v955 = vsel %vm213, %v932, 0
        %v958 = vsel %vm213, %v933, 0
        %v961 = vsel %vm213, %v934, 0
        %v964 = vsel %vm213, %v935, 0
        %966 = vmatprep.subr.mxu0 0.0
        %967 = vmatpush1.msra.mxu0 %v937
        %968 = vmatprep.subr.mxu0 0.0
        %969 = vmatpush1.msra.mxu0 %v938
        %970 = vmatprep.subr.mxu0 0.0
        %971 = vmatpush1.msra.mxu0 %v939
        %972 = vmatprep.subr.mxu0 0.0
        %973 = vmatpush1.msra.mxu0 %v940
        %974 = vmatprep.subr.mxu0 0.0
        %975 = vmatpush1.msra.mxu0 %v941
        %976 = vmatprep.subr.mxu0 0.0
        %977 = vmatpush1.msra.mxu0 0.0
        %978 = vmatprep.subr.mxu0 0.0
        %979 = vmatpush1.msra.mxu0 0.0
        %980 = vmatprep.subr.mxu0 0.0
        %981 = vmatpush1.msra.mxu0 0.0
        %982 = vmatprep.subr.mxu0 0.0
        %983 = vmatpush1.msra.mxu0 0.0
        %984 = vmatprep.subr.mxu0 0.0
        %985 = vmatpush1.msra.mxu0 0.0
        %986 = vmatprep.subr.mxu0 0.0
        %987 = vmatpush1.msra.mxu0 0.0
        %988 = vmatprep.subr.mxu0 0.0
        %989 = vmatpush1.msra.mxu0 0.0
        %990 = vmatprep.subr.mxu0 0.0
        %991 = vmatpush1.msra.mxu0 0.0
        %992 = vmatprep.subr.mxu0 0.0
        %993 = vmatpush1.msra.mxu0 0.0
        %994 = vmatprep.subr.mxu0 0.0
        %995 = vmatpush1.msra.mxu0 0.0
        %996 = vmatprep.subr.mxu0 0.0
        %997 = vmatpush1.msra.mxu0 0.0
        %998 = vmatprep.subr.mxu0 0.0
        %999 = vmatpush1.msra.mxu0 0.0
        %1000 = vmatprep.subr.mxu0 0.0
        %1001 = vmatpush1.msra.mxu0 0.0
        %1002 = vmatprep.subr.mxu0 0.0
        %1003 = vmatpush1.msra.mxu0 0.0
        %1004 = vmatprep.subr.mxu0 0.0
        %1005 = vmatpush1.msra.mxu0 0.0
        %1006 = vmatprep.subr.mxu0 0.0
        %1007 = vmatpush1.msra.mxu0 0.0
        %1008 = vmatprep.subr.mxu0 0.0
        %1009 = vmatpush1.msra.mxu0 0.0
        %1010 = vmatprep.subr.mxu0 0.0
        %1011 = vmatpush1.msra.mxu0 0.0
        %1012 = vmatprep.subr.mxu0 0.0
        %1013 = vmatpush1.msra.mxu0 0.0
        %1014 = vmatprep.subr.mxu0 0.0
        %1015 = vmatpush1.msra.mxu0 0.0
        %1016 = vmatprep.subr.mxu0 0.0
        %1017 = vmatpush1.msra.mxu0 0.0
        %1018 = vmatprep.subr.mxu0 0.0
        %1019 = vmatpush1.msra.mxu0 0.0
        %1020 = vmatprep.subr.mxu0 0.0
        %1021 = vmatpush1.msra.mxu0 0.0
        %1022 = vmatprep.subr.mxu0 0.0
        %1023 = vmatpush1.msra.mxu0 0.0
        %1024 = vmatprep.subr.mxu0 0.0
        %1025 = vmatpush1.msra.mxu0 0.0
        %1026 = vmatprep.subr.mxu0 0.0
        %1027 = vmatpush1.msra.mxu0 0.0
        %1028 = vmatprep.subr.mxu0 0.0
        %1029 = vmatpush1.msra.mxu0 0.0
        %1030 = vmatprep.mubr.f32.mxu0 0.0
        %1031 = vmatmul.mubr.f32.gmra.mrb[0].mxu0 %v943
        %v1032 = vpop.f32.mrb[0].mxu0
        %v1033 = vadd.f32 0.0, %v1032
        %v1034 = vpop.f32.mrb[0].mxu0
        %1035 = vmatprep.mubr.f32.mxu0 0.0
        %1036 = vmatmul.mubr.f32.gmra.mrb[0].mxu0 %v946
        %v1037 = vpop.f32.mrb[0].mxu0
        %v1038 = vadd.f32 0.0, %v1037
        %v1039 = vpop.f32.mrb[0].mxu0
        %1040 = vmatprep.mubr.f32.mxu0 0.0
        %1041 = vmatmul.mubr.f32.gmra.mrb[0].mxu0 %v949
        %v1042 = vpop.f32.mrb[0].mxu0
        %v1043 = vadd.f32 0.0, %v1042
        %v1044 = vpop.f32.mrb[0].mxu0
        %1045 = vmatprep.mubr.f32.mxu0 0.0
        %1046 = vmatmul.mubr.f32.gmra.mrb[0].mxu0 %v952
        %v1047 = vpop.f32.mrb[0].mxu0
        %v1048 = vadd.f32 0.0, %v1047
        %v1049 = vpop.f32.mrb[0].mxu0
        %1050 = vmatprep.mubr.f32.mxu0 0.0
        %1051 = vmatmul.mubr.f32.gmra.mrb[0].mxu0 %v955
        %v1052 = vpop.f32.mrb[0].mxu0
        %v1053 = vadd.f32 0.0, %v1052
        %v1054 = vpop.f32.mrb[0].mxu0
        %1055 = vmatprep.mubr.f32.mxu0 0.0
        %1056 = vmatmul.mubr.f32.gmra.mrb[0].mxu0 %v958
        %v1057 = vpop.f32.mrb[0].mxu0
        %v1058 = vadd.f32 0.0, %v1057
        %v1059 = vpop.f32.mrb[0].mxu0
        %1060 = vmatprep.mubr.f32.mxu0 0.0
        %1061 = vmatmul.mubr.f32.gmra.mrb[0].mxu0 %v961
        %v1062 = vpop.f32.mrb[0].mxu0
        %v1063 = vadd.f32 0.0, %v1062
        %v1064 = vpop.f32.mrb[0].mxu0
        %1065 = vmatprep.mubr.f32.mxu0 0.0
        %1066 = vmatmul.mubr.f32.gmra.mrb[0].mxu0 %v964
        %v1067 = vpop.f32.mrb[0].mxu0
        %v1068 = vadd.f32 0.0, %v1067
        %v1069 = vpop.f32.mrb[0].mxu0
        %1070 = vdwg.mxu0
        %v1071 = vadd.f32 %v920, %v1033
        %v1072 = vadd.f32 %v921, %v1038
        %v1073 = vadd.f32 %v922, %v1043
        %v1074 = vadd.f32 %v923, %v1048
        %v1075 = vadd.f32 %v924, %v1053
        %v1076 = vadd.f32 %v925, %v1058
        %v1077 = vadd.f32 %v926, %v1063
        %v1078 = vadd.f32 %v927, %v1068
        %s1079 = sadd.s32 %s183, 2
        %s1080 = smul.u32 %s1079, 16
        %s1081 = scalar_lea.vmem %s182, %s1080
        %v1082 = vld [vmem:[%s1081] sm:$0xff]
        %v1083 = vld [vmem:[%s1081 + $0x10] sm:$0xff]
        %v1084 = vld [vmem:[%s1081 + $0x20] sm:$0xff]
        %v1085 = vld [vmem:[%s1081 + $0x30] sm:$0xff]
        %v1086 = vld [vmem:[%s1081 + $0x40] sm:$0xff]
        %v1087 = vld [vmem:[%s1081 + $0x50] sm:$0xff]
        %v1088 = vld [vmem:[%s1081 + $0x60] sm:$0xff]
        %v1089 = vld [vmem:[%s1081 + $0x70] sm:$0xff]
        %s1090 = scalar_lea.vmem %s1, 240
        %v1091 = vld [vmem:[%s1090] sm:$0xff]
        %v1092 = vld [vmem:[%s1090 + $0x8] sm:$0xff]
        %v1093 = vld [vmem:[%s1090 + $0x10] sm:$0xff]
        %v1094 = vld [vmem:[%s1090 + $0x18] sm:$0xff]
        %v1095 = vld [vmem:[%s1090 + $0x20] sm:$0xff]
        %v1097 = vsel %vm213, %v1082, 0
        %v1100 = vsel %vm213, %v1083, 0
        %v1103 = vsel %vm213, %v1084, 0
        %v1106 = vsel %vm213, %v1085, 0
        %v1109 = vsel %vm213, %v1086, 0
        %v1112 = vsel %vm213, %v1087, 0
        %v1115 = vsel %vm213, %v1088, 0
        %v1118 = vsel %vm213, %v1089, 0
        %1120 = vmatprep.subr.mxu0 0.0
        %1121 = vmatpush1.msra.mxu0 %v1091
        %1122 = vmatprep.subr.mxu0 0.0
        %1123 = vmatpush1.msra.mxu0 %v1092
        %1124 = vmatprep.subr.mxu0 0.0
        %1125 = vmatpush1.msra.mxu0 %v1093
        %1126 = vmatprep.subr.mxu0 0.0
        %1127 = vmatpush1.msra.mxu0 %v1094
        %1128 = vmatprep.subr.mxu0 0.0
        %1129 = vmatpush1.msra.mxu0 %v1095
        %1130 = vmatprep.subr.mxu0 0.0
        %1131 = vmatpush1.msra.mxu0 0.0
        %1132 = vmatprep.subr.mxu0 0.0
        %1133 = vmatpush1.msra.mxu0 0.0
        %1134 = vmatprep.subr.mxu0 0.0
        %1135 = vmatpush1.msra.mxu0 0.0
        %1136 = vmatprep.subr.mxu0 0.0
        %1137 = vmatpush1.msra.mxu0 0.0
        %1138 = vmatprep.subr.mxu0 0.0
        %1139 = vmatpush1.msra.mxu0 0.0
        %1140 = vmatprep.subr.mxu0 0.0
        %1141 = vmatpush1.msra.mxu0 0.0
        %1142 = vmatprep.subr.mxu0 0.0
        %1143 = vmatpush1.msra.mxu0 0.0
        %1144 = vmatprep.subr.mxu0 0.0
        %1145 = vmatpush1.msra.mxu0 0.0
        %1146 = vmatprep.subr.mxu0 0.0
        %1147 = vmatpush1.msra.mxu0 0.0
        %1148 = vmatprep.subr.mxu0 0.0
        %1149 = vmatpush1.msra.mxu0 0.0
        %1150 = vmatprep.subr.mxu0 0.0
        %1151 = vmatpush1.msra.mxu0 0.0
        %1152 = vmatprep.subr.mxu0 0.0
        %1153 = vmatpush1.msra.mxu0 0.0
        %1154 = vmatprep.subr.mxu0 0.0
        %1155 = vmatpush1.msra.mxu0 0.0
        %1156 = vmatprep.subr.mxu0 0.0
        %1157 = vmatpush1.msra.mxu0 0.0
        %1158 = vmatprep.subr.mxu0 0.0
        %1159 = vmatpush1.msra.mxu0 0.0
        %1160 = vmatprep.subr.mxu0 0.0
        %1161 = vmatpush1.msra.mxu0 0.0
        %1162 = vmatprep.subr.mxu0 0.0
        %1163 = vmatpush1.msra.mxu0 0.0
        %1164 = vmatprep.subr.mxu0 0.0
        %1165 = vmatpush1.msra.mxu0 0.0
        %1166 = vmatprep.subr.mxu0 0.0
        %1167 = vmatpush1.msra.mxu0 0.0
        %1168 = vmatprep.subr.mxu0 0.0
        %1169 = vmatpush1.msra.mxu0 0.0
        %1170 = vmatprep.subr.mxu0 0.0
        %1171 = vmatpush1.msra.mxu0 0.0
        %1172 = vmatprep.subr.mxu0 0.0
        %1173 = vmatpush1.msra.mxu0 0.0
        %1174 = vmatprep.subr.mxu0 0.0
        %1175 = vmatpush1.msra.mxu0 0.0
        %1176 = vmatprep.subr.mxu0 0.0
        %1177 = vmatpush1.msra.mxu0 0.0
        %1178 = vmatprep.subr.mxu0 0.0
        %1179 = vmatpush1.msra.mxu0 0.0
        %1180 = vmatprep.subr.mxu0 0.0
        %1181 = vmatpush1.msra.mxu0 0.0
        %1182 = vmatprep.subr.mxu0 0.0
        %1183 = vmatpush1.msra.mxu0 0.0
        %1184 = vmatprep.mubr.f32.mxu0 0.0
        %1185 = vmatmul.mubr.f32.gmra.mrb[0].mxu0 %v1097
        %v1186 = vpop.f32.mrb[0].mxu0
        %v1187 = vadd.f32 0.0, %v1186
        %v1188 = vpop.f32.mrb[0].mxu0
        %1189 = vmatprep.mubr.f32.mxu0 0.0
        %1190 = vmatmul.mubr.f32.gmra.mrb[0].mxu0 %v1100
        %v1191 = vpop.f32.mrb[0].mxu0
        %v1192 = vadd.f32 0.0, %v1191
        %v1193 = vpop.f32.mrb[0].mxu0
        %1194 = vmatprep.mubr.f32.mxu0 0.0
        %1195 = vmatmul.mubr.f32.gmra.mrb[0].mxu0 %v1103
        %v1196 = vpop.f32.mrb[0].mxu0
        %v1197 = vadd.f32 0.0, %v1196
        %v1198 = vpop.f32.mrb[0].mxu0
        %1199 = vmatprep.mubr.f32.mxu0 0.0
        %1200 = vmatmul.mubr.f32.gmra.mrb[0].mxu0 %v1106
        %v1201 = vpop.f32.mrb[0].mxu0
        %v1202 = vadd.f32 0.0, %v1201
        %v1203 = vpop.f32.mrb[0].mxu0
        %1204 = vmatprep.mubr.f32.mxu0 0.0
        %1205 = vmatmul.mubr.f32.gmra.mrb[0].mxu0 %v1109
        %v1206 = vpop.f32.mrb[0].mxu0
        %v1207 = vadd.f32 0.0, %v1206
        %v1208 = vpop.f32.mrb[0].mxu0
        %1209 = vmatprep.mubr.f32.mxu0 0.0
        %1210 = vmatmul.mubr.f32.gmra.mrb[0].mxu0 %v1112
        %v1211 = vpop.f32.mrb[0].mxu0
        %v1212 = vadd.f32 0.0, %v1211
        %v1213 = vpop.f32.mrb[0].mxu0
        %1214 = vmatprep.mubr.f32.mxu0 0.0
        %1215 = vmatmul.mubr.f32.gmra.mrb[0].mxu0 %v1115
        %v1216 = vpop.f32.mrb[0].mxu0
        %v1217 = vadd.f32 0.0, %v1216
        %v1218 = vpop.f32.mrb[0].mxu0
        %1219 = vmatprep.mubr.f32.mxu0 0.0
        %1220 = vmatmul.mubr.f32.gmra.mrb[0].mxu0 %v1118
        %v1221 = vpop.f32.mrb[0].mxu0
        %v1222 = vadd.f32 0.0, %v1221
        %v1223 = vpop.f32.mrb[0].mxu0
        %1224 = vdwg.mxu0
        %v1225 = vadd.f32 %v1071, %v1187
        %v1226 = vadd.f32 %v1072, %v1192
        %v1227 = vadd.f32 %v1073, %v1197
        %v1228 = vadd.f32 %v1074, %v1202
        %v1229 = vadd.f32 %v1075, %v1207
        %v1230 = vadd.f32 %v1076, %v1212
        %v1231 = vadd.f32 %v1077, %v1217
        %v1232 = vadd.f32 %v1078, %v1222
        %v1233 = vld [vmem:[%s1081 + $0x1] sm:$0xff]
        %v1234 = vld [vmem:[%s1081 + $0x11] sm:$0xff]
        %v1235 = vld [vmem:[%s1081 + $0x21] sm:$0xff]
        %v1236 = vld [vmem:[%s1081 + $0x31] sm:$0xff]
        %v1237 = vld [vmem:[%s1081 + $0x41] sm:$0xff]
        %v1238 = vld [vmem:[%s1081 + $0x51] sm:$0xff]
        %v1239 = vld [vmem:[%s1081 + $0x61] sm:$0xff]
        %v1240 = vld [vmem:[%s1081 + $0x71] sm:$0xff]
        %s1241 = scalar_lea.vmem %s1, 280
        %v1242 = vld [vmem:[%s1241] sm:$0xff]
        %v1243 = vld [vmem:[%s1241 + $0x8] sm:$0xff]
        %v1244 = vld [vmem:[%s1241 + $0x10] sm:$0xff]
        %v1245 = vld [vmem:[%s1241 + $0x18] sm:$0xff]
        %v1246 = vld [vmem:[%s1241 + $0x20] sm:$0xff]
        %v1248 = vsel %vm213, %v1233, 0
        %v1251 = vsel %vm213, %v1234, 0
        %v1254 = vsel %vm213, %v1235, 0
        %v1257 = vsel %vm213, %v1236, 0
        %v1260 = vsel %vm213, %v1237, 0
        %v1263 = vsel %vm213, %v1238, 0
        %v1266 = vsel %vm213, %v1239, 0
        %v1269 = vsel %vm213, %v1240, 0
        %1271 = vmatprep.subr.mxu0 0.0
        %1272 = vmatpush1.msra.mxu0 %v1242
        %1273 = vmatprep.subr.mxu0 0.0
        %1274 = vmatpush1.msra.mxu0 %v1243
        %1275 = vmatprep.subr.mxu0 0.0
        %1276 = vmatpush1.msra.mxu0 %v1244
        %1277 = vmatprep.subr.mxu0 0.0
        %1278 = vmatpush1.msra.mxu0 %v1245
        %1279 = vmatprep.subr.mxu0 0.0
        %1280 = vmatpush1.msra.mxu0 %v1246
        %1281 = vmatprep.subr.mxu0 0.0
        %1282 = vmatpush1.msra.mxu0 0.0
        %1283 = vmatprep.subr.mxu0 0.0
        %1284 = vmatpush1.msra.mxu0 0.0
        %1285 = vmatprep.subr.mxu0 0.0
        %1286 = vmatpush1.msra.mxu0 0.0
        %1287 = vmatprep.subr.mxu0 0.0
        %1288 = vmatpush1.msra.mxu0 0.0
        %1289 = vmatprep.subr.mxu0 0.0
        %1290 = vmatpush1.msra.mxu0 0.0
        %1291 = vmatprep.subr.mxu0 0.0
        %1292 = vmatpush1.msra.mxu0 0.0
        %1293 = vmatprep.subr.mxu0 0.0
        %1294 = vmatpush1.msra.mxu0 0.0
        %1295 = vmatprep.subr.mxu0 0.0
        %1296 = vmatpush1.msra.mxu0 0.0
        %1297 = vmatprep.subr.mxu0 0.0
        %1298 = vmatpush1.msra.mxu0 0.0
        %1299 = vmatprep.subr.mxu0 0.0
        %1300 = vmatpush1.msra.mxu0 0.0
        %1301 = vmatprep.subr.mxu0 0.0
        %1302 = vmatpush1.msra.mxu0 0.0
        %1303 = vmatprep.subr.mxu0 0.0
        %1304 = vmatpush1.msra.mxu0 0.0
        %1305 = vmatprep.subr.mxu0 0.0
        %1306 = vmatpush1.msra.mxu0 0.0
        %1307 = vmatprep.subr.mxu0 0.0
        %1308 = vmatpush1.msra.mxu0 0.0
        %1309 = vmatprep.subr.mxu0 0.0
        %1310 = vmatpush1.msra.mxu0 0.0
        %1311 = vmatprep.subr.mxu0 0.0
        %1312 = vmatpush1.msra.mxu0 0.0
        %1313 = vmatprep.subr.mxu0 0.0
        %1314 = vmatpush1.msra.mxu0 0.0
        %1315 = vmatprep.subr.mxu0 0.0
        %1316 = vmatpush1.msra.mxu0 0.0
        %1317 = vmatprep.subr.mxu0 0.0
        %1318 = vmatpush1.msra.mxu0 0.0
        %1319 = vmatprep.subr.mxu0 0.0
        %1320 = vmatpush1.msra.mxu0 0.0
        %1321 = vmatprep.subr.mxu0 0.0
        %1322 = vmatpush1.msra.mxu0 0.0
        %1323 = vmatprep.subr.mxu0 0.0
        %1324 = vmatpush1.msra.mxu0 0.0
        %1325 = vmatprep.subr.mxu0 0.0
        %1326 = vmatpush1.msra.mxu0 0.0
        %1327 = vmatprep.subr.mxu0 0.0
        %1328 = vmatpush1.msra.mxu0 0.0
        %1329 = vmatprep.subr.mxu0 0.0
        %1330 = vmatpush1.msra.mxu0 0.0
        %1331 = vmatprep.subr.mxu0 0.0
        %1332 = vmatpush1.msra.mxu0 0.0
        %1333 = vmatprep.subr.mxu0 0.0
        %1334 = vmatpush1.msra.mxu0 0.0
        %1335 = vmatprep.mubr.f32.mxu0 0.0
        %1336 = vmatmul.mubr.f32.gmra.mrb[0].mxu0 %v1248
        %v1337 = vpop.f32.mrb[0].mxu0
        %v1338 = vadd.f32 0.0, %v1337
        %v1339 = vpop.f32.mrb[0].mxu0
        %1340 = vmatprep.mubr.f32.mxu0 0.0
        %1341 = vmatmul.mubr.f32.gmra.mrb[0].mxu0 %v1251
        %v1342 = vpop.f32.mrb[0].mxu0
        %v1343 = vadd.f32 0.0, %v1342
        %v1344 = vpop.f32.mrb[0].mxu0
        %1345 = vmatprep.mubr.f32.mxu0 0.0
        %1346 = vmatmul.mubr.f32.gmra.mrb[0].mxu0 %v1254
        %v1347 = vpop.f32.mrb[0].mxu0
        %v1348 = vadd.f32 0.0, %v1347
        %v1349 = vpop.f32.mrb[0].mxu0
        %1350 = vmatprep.mubr.f32.mxu0 0.0
        %1351 = vmatmul.mubr.f32.gmra.mrb[0].mxu0 %v1257
        %v1352 = vpop.f32.mrb[0].mxu0
        %v1353 = vadd.f32 0.0, %v1352
        %v1354 = vpop.f32.mrb[0].mxu0
        %1355 = vmatprep.mubr.f32.mxu0 0.0
        %1356 = vmatmul.mubr.f32.gmra.mrb[0].mxu0 %v1260
        %v1357 = vpop.f32.mrb[0].mxu0
        %v1358 = vadd.f32 0.0, %v1357
        %v1359 = vpop.f32.mrb[0].mxu0
        %1360 = vmatprep.mubr.f32.mxu0 0.0
        %1361 = vmatmul.mubr.f32.gmra.mrb[0].mxu0 %v1263
        %v1362 = vpop.f32.mrb[0].mxu0
        %v1363 = vadd.f32 0.0, %v1362
        %v1364 = vpop.f32.mrb[0].mxu0
        %1365 = vmatprep.mubr.f32.mxu0 0.0
        %1366 = vmatmul.mubr.f32.gmra.mrb[0].mxu0 %v1266
        %v1367 = vpop.f32.mrb[0].mxu0
        %v1368 = vadd.f32 0.0, %v1367
        %v1369 = vpop.f32.mrb[0].mxu0
        %1370 = vmatprep.mubr.f32.mxu0 0.0
        %1371 = vmatmul.mubr.f32.gmra.mrb[0].mxu0 %v1269
        %v1372 = vpop.f32.mrb[0].mxu0
        %v1373 = vadd.f32 0.0, %v1372
        %v1374 = vpop.f32.mrb[0].mxu0
        %1375 = vdwg.mxu0
        %v1376 = vadd.f32 %v1225, %v1338
        %v1377 = vadd.f32 %v1226, %v1343
        %v1378 = vadd.f32 %v1227, %v1348
        %v1379 = vadd.f32 %v1228, %v1353
        %v1380 = vadd.f32 %v1229, %v1358
        %v1381 = vadd.f32 %v1230, %v1363
        %v1382 = vadd.f32 %v1231, %v1368
        %v1383 = vadd.f32 %v1232, %v1373
        %v1384 = vld [vmem:[%s1081 + $0x2] sm:$0xff]
        %v1385 = vld [vmem:[%s1081 + $0x12] sm:$0xff]
        %v1386 = vld [vmem:[%s1081 + $0x22] sm:$0xff]
        %v1387 = vld [vmem:[%s1081 + $0x32] sm:$0xff]
        %v1388 = vld [vmem:[%s1081 + $0x42] sm:$0xff]
        %v1389 = vld [vmem:[%s1081 + $0x52] sm:$0xff]
        %v1390 = vld [vmem:[%s1081 + $0x62] sm:$0xff]
        %v1391 = vld [vmem:[%s1081 + $0x72] sm:$0xff]
        %s1392 = scalar_lea.vmem %s1, 320
        %v1393 = vld [vmem:[%s1392] sm:$0xff]
        %v1394 = vld [vmem:[%s1392 + $0x8] sm:$0xff]
        %v1395 = vld [vmem:[%s1392 + $0x10] sm:$0xff]
        %v1396 = vld [vmem:[%s1392 + $0x18] sm:$0xff]
        %v1397 = vld [vmem:[%s1392 + $0x20] sm:$0xff]
        %v1399 = vsel %vm213, %v1384, 0
        %v1402 = vsel %vm213, %v1385, 0
        %v1405 = vsel %vm213, %v1386, 0
        %v1408 = vsel %vm213, %v1387, 0
        %v1411 = vsel %vm213, %v1388, 0
        %v1414 = vsel %vm213, %v1389, 0
        %v1417 = vsel %vm213, %v1390, 0
        %v1420 = vsel %vm213, %v1391, 0
        %1422 = vmatprep.subr.mxu0 0.0
        %1423 = vmatpush1.msra.mxu0 %v1393
        %1424 = vmatprep.subr.mxu0 0.0
        %1425 = vmatpush1.msra.mxu0 %v1394
        %1426 = vmatprep.subr.mxu0 0.0
        %1427 = vmatpush1.msra.mxu0 %v1395
        %1428 = vmatprep.subr.mxu0 0.0
        %1429 = vmatpush1.msra.mxu0 %v1396
        %1430 = vmatprep.subr.mxu0 0.0
        %1431 = vmatpush1.msra.mxu0 %v1397
        %1432 = vmatprep.subr.mxu0 0.0
        %1433 = vmatpush1.msra.mxu0 0.0
        %1434 = vmatprep.subr.mxu0 0.0
        %1435 = vmatpush1.msra.mxu0 0.0
        %1436 = vmatprep.subr.mxu0 0.0
        %1437 = vmatpush1.msra.mxu0 0.0
        %1438 = vmatprep.subr.mxu0 0.0
        %1439 = vmatpush1.msra.mxu0 0.0
        %1440 = vmatprep.subr.mxu0 0.0
        %1441 = vmatpush1.msra.mxu0 0.0
        %1442 = vmatprep.subr.mxu0 0.0
        %1443 = vmatpush1.msra.mxu0 0.0
        %1444 = vmatprep.subr.mxu0 0.0
        %1445 = vmatpush1.msra.mxu0 0.0
        %1446 = vmatprep.subr.mxu0 0.0
        %1447 = vmatpush1.msra.mxu0 0.0
        %1448 = vmatprep.subr.mxu0 0.0
        %1449 = vmatpush1.msra.mxu0 0.0
        %1450 = vmatprep.subr.mxu0 0.0
        %1451 = vmatpush1.msra.mxu0 0.0
        %1452 = vmatprep.subr.mxu0 0.0
        %1453 = vmatpush1.msra.mxu0 0.0
        %1454 = vmatprep.subr.mxu0 0.0
        %1455 = vmatpush1.msra.mxu0 0.0
        %1456 = vmatprep.subr.mxu0 0.0
        %1457 = vmatpush1.msra.mxu0 0.0
        %1458 = vmatprep.subr.mxu0 0.0
        %1459 = vmatpush1.msra.mxu0 0.0
        %1460 = vmatprep.subr.mxu0 0.0
        %1461 = vmatpush1.msra.mxu0 0.0
        %1462 = vmatprep.subr.mxu0 0.0
        %1463 = vmatpush1.msra.mxu0 0.0
        %1464 = vmatprep.subr.mxu0 0.0
        %1465 = vmatpush1.msra.mxu0 0.0
        %1466 = vmatprep.subr.mxu0 0.0
        %1467 = vmatpush1.msra.mxu0 0.0
        %1468 = vmatprep.subr.mxu0 0.0
        %1469 = vmatpush1.msra.mxu0 0.0
        %1470 = vmatprep.subr.mxu0 0.0
        %1471 = vmatpush1.msra.mxu0 0.0
        %1472 = vmatprep.subr.mxu0 0.0
        %1473 = vmatpush1.msra.mxu0 0.0
        %1474 = vmatprep.subr.mxu0 0.0
        %1475 = vmatpush1.msra.mxu0 0.0
        %1476 = vmatprep.subr.mxu0 0.0
        %1477 = vmatpush1.msra.mxu0 0.0
        %1478 = vmatprep.subr.mxu0 0.0
        %1479 = vmatpush1.msra.mxu0 0.0
        %1480 = vmatprep.subr.mxu0 0.0
        %1481 = vmatpush1.msra.mxu0 0.0
        %1482 = vmatprep.subr.mxu0 0.0
        %1483 = vmatpush1.msra.mxu0 0.0
        %1484 = vmatprep.subr.mxu0 0.0
        %1485 = vmatpush1.msra.mxu0 0.0
        %1486 = vmatprep.mubr.f32.mxu0 0.0
        %1487 = vmatmul.mubr.f32.gmra.mrb[0].mxu0 %v1399
        %v1488 = vpop.f32.mrb[0].mxu0
        %v1489 = vadd.f32 0.0, %v1488
        %v1490 = vpop.f32.mrb[0].mxu0
        %1491 = vmatprep.mubr.f32.mxu0 0.0
        %1492 = vmatmul.mubr.f32.gmra.mrb[0].mxu0 %v1402
        %v1493 = vpop.f32.mrb[0].mxu0
        %v1494 = vadd.f32 0.0, %v1493
        %v1495 = vpop.f32.mrb[0].mxu0
        %1496 = vmatprep.mubr.f32.mxu0 0.0
        %1497 = vmatmul.mubr.f32.gmra.mrb[0].mxu0 %v1405
        %v1498 = vpop.f32.mrb[0].mxu0
        %v1499 = vadd.f32 0.0, %v1498
        %v1500 = vpop.f32.mrb[0].mxu0
        %1501 = vmatprep.mubr.f32.mxu0 0.0
        %1502 = vmatmul.mubr.f32.gmra.mrb[0].mxu0 %v1408
        %v1503 = vpop.f32.mrb[0].mxu0
        %v1504 = vadd.f32 0.0, %v1503
        %v1505 = vpop.f32.mrb[0].mxu0
        %1506 = vmatprep.mubr.f32.mxu0 0.0
        %1507 = vmatmul.mubr.f32.gmra.mrb[0].mxu0 %v1411
        %v1508 = vpop.f32.mrb[0].mxu0
        %v1509 = vadd.f32 0.0, %v1508
        %v1510 = vpop.f32.mrb[0].mxu0
        %1511 = vmatprep.mubr.f32.mxu0 0.0
        %1512 = vmatmul.mubr.f32.gmra.mrb[0].mxu0 %v1414
        %v1513 = vpop.f32.mrb[0].mxu0
        %v1514 = vadd.f32 0.0, %v1513
        %v1515 = vpop.f32.mrb[0].mxu0
        %1516 = vmatprep.mubr.f32.mxu0 0.0
        %1517 = vmatmul.mubr.f32.gmra.mrb[0].mxu0 %v1417
        %v1518 = vpop.f32.mrb[0].mxu0
        %v1519 = vadd.f32 0.0, %v1518
        %v1520 = vpop.f32.mrb[0].mxu0
        %1521 = vmatprep.mubr.f32.mxu0 0.0
        %1522 = vmatmul.mubr.f32.gmra.mrb[0].mxu0 %v1420
        %v1523 = vpop.f32.mrb[0].mxu0
        %v1524 = vadd.f32 0.0, %v1523
        %v1525 = vpop.f32.mrb[0].mxu0
        %1526 = vdwg.mxu0
        %v1527 = vadd.f32 %v1376, %v1489
        %v1528 = vadd.f32 %v1377, %v1494
        %v1529 = vadd.f32 %v1378, %v1499
        %v1530 = vadd.f32 %v1379, %v1504
        %v1531 = vadd.f32 %v1380, %v1509
        %v1532 = vadd.f32 %v1381, %v1514
        %v1533 = vadd.f32 %v1382, %v1519
        %v1534 = vadd.f32 %v1383, %v1524
        %v1535 = vld [vmem:[%s2] sm:$0x1]
        %v1537 = vlaneseq
        %v1538 = vshrl.u32 %v1537, 7
        %v1539 = vsub.s32 0, %v1538
        %v1540 = vrot.slane %v1535, %v1539
        %v1542 = vadd.f32 %v1527, %v1540
        %v1543 = vadd.f32 %v1528, %v1540
        %v1544 = vadd.f32 %v1529, %v1540
        %v1545 = vadd.f32 %v1530, %v1540
        %v1546 = vadd.f32 %v1531, %v1540
        %v1547 = vadd.f32 %v1532, %v1540
        %v1548 = vadd.f32 %v1533, %v1540
        %v1549 = vadd.f32 %v1534, %v1540
        %vm1550 = vcmask 523264
        %1551 = vst.msk [vmem:[%s177] sm:$0xff] %vm1550, %v1542
        %1552 = vst.msk [vmem:[%s177 + $0x8] sm:$0xff] %vm1550, %v1543
        %1553 = vst.msk [vmem:[%s177 + $0x10] sm:$0xff] %vm1550, %v1544
        %1554 = vst.msk [vmem:[%s177 + $0x18] sm:$0xff] %vm1550, %v1545
        %1555 = vst.msk [vmem:[%s177 + $0x20] sm:$0xff] %vm1550, %v1546
        %1556 = vst.msk [vmem:[%s177 + $0x28] sm:$0xff] %vm1550, %v1547
        %1557 = vst.msk [vmem:[%s177 + $0x30] sm:$0xff] %vm1550, %v1548
        %1558 = vst.msk [vmem:[%s177 + $0x38] sm:$0xff] %vm1550, %v1549
        %s1559 = sand.u32 %s107, 1
        %s1560 = scalar_lea.sflag [#allocation3], %s1559
        %s1561 = sand.u32 %s107, 1
        %s1562 = smul.addr %s1561, 64
        %s1563 = scalar_lea.vmem [#allocation2], %s1562
        // Predicated region
        $region33: #{tpu_custom_call.1} parent=31 // pred_check
          %p1564 = pneg %p117
        $region34: #{tpu_custom_call.1} parent=31 // pred_check_branch
          %1566 = sbr.rel (%p1564) target = $region36
        $region35: #{tpu_custom_call.1} parent=31 // pred_region
          %s1568 = ssub.s32 1024, 1024
          %1569 = vsyncadd %s1560, %s1568
          %s1570 = smul.addr %s22, 8
          %s1571 = smul.addr %s21, 8
          %s1572 = sadd.s32 %s1570, %s1571
          %s1573 = smul.addr %s1572, 128
          %s1574 = scalar_lea.hbm %s3, %s1573
          %s1575 = sshll.u32 %s1563, 4
          %s1576 = int_to_ptr.vmem [resolvable:$true] %s1575
          %1581 = dma.vmem_to_hbm [thread:$0]  %s1576, 1024, %s1574, %s1560, 128, 128, 8
        $region36: #{tpu_custom_call.1} parent=31 // pred_fallthru
          _
      $region32: #{tpu_custom_call.1} parent=5 // pred_fallthru
        _
      %p1582 = scmp.le.s32.totalorder 2, %s12
      // Predicated region
      $region37: #{tpu_custom_call.1} parent=5 // pred_check
        %p1583 = pneg %p1582
      $region38: #{tpu_custom_call.1} parent=5 // pred_check_branch
        %1585 = sbr.rel (%p1583) target = $region40
      $region39: #{tpu_custom_call.1} parent=5 // pred_region
        %s1586 = ssub.s32 %s12, 2
        // Predicated region
        $region41: #{tpu_custom_call.1} parent=39 // pred_check
          %p1587 = pneg %p123
        $region42: #{tpu_custom_call.1} parent=39 // pred_check_branch
          %1589 = sbr.rel (%p1587) target = $region44
        $region43: #{tpu_custom_call.1} parent=39 // pred_region
          %s1590 = sand.u32 %s108, 1
          %s1591 = scalar_lea.sflag [#allocation3], %s1590
          %s1592 = sand.u32 %s108, 1
          %s1593 = smul.addr %s1592, 64
          %s1594 = scalar_lea.vmem [#allocation2], %s1593
          %1595 = dma.done %s1591, 1024
        $region44: #{tpu_custom_call.1} parent=39 // pred_fallthru
          _
      $region40: #{tpu_custom_call.1} parent=5 // pred_fallthru
        _
    $region6: #{tpu_custom_call.1} parent=1 // loop_footer
      %s16 = sadd.s32 1, %s12
    $region7: #{tpu_custom_call.1} parent=1 // loop_footer_branch
      %11 = sbr.rel target = $region3
    $region8: #{tpu_custom_call.1} parent=1 // loop_exit
      _
    %1596 = vsyncpa [#allocation3], 1
    %s1597 = scalar_lea.sflag [#allocation3], 1
    %1598 = vsyncpa %s1597, 1

</llo_original>
